<compile_context>
chip_gen: v5e
topology: v5e:2x2
jax: 0.10.0
libtpu: 0.0.40
codegen_flags: <defaults>
</compile_context>

<pallas_src>
import jax
import jax.numpy as jnp
from jax.experimental import pallas as pl
from jax.experimental.pallas import tpu as pltpu

D_IN = 3
D_OUT = 3
H = 16


# ---------------------------------------------------------------------------
# Host-side parameter layout (done once, outside the grid loop).
# ---------------------------------------------------------------------------
def pack_params(params):
    """Pre-layout the 6 (W, b) pairs for the kernel.

    * PyTorch nn.Linear layout is kept: W_k (out_k, in_k), b_k (out_k,). With
      batch on the lane axis the kernel computes y^T = W @ h^T, so this is
      already the MXU-ready orientation -> zero in-kernel slicing/relayout.
    * Layers 2..6 weights are cast to bf16 (MXU-native on every generation);
      biases stay f32 and are added to the f32 accumulator.
    * Layer 1 (K=3) stays f32: it runs as broadcast-FMAs on the VPU.
    * Layer 6 W/b are padded from 3 to 8 output rows (sublane aligned); the
      kernel slices rows 0:3 at the store.

    Returns a flat list [w1, b1, w2, b2, ..., w6, b6].
    """
    flat = []
    for li, (w, b) in enumerate(params):
        w = jnp.asarray(w, jnp.float32)
        b = jnp.asarray(b, jnp.float32).reshape(-1, 1)
        if li == 5:                                  # pad final layer to 8 rows
            out_k, in_k = w.shape
            w = jnp.zeros((8, in_k), jnp.float32).at[:out_k].set(w)
            b = jnp.zeros((8, 1), jnp.float32).at[:out_k].set(b)
        if li >= 1:                                  # MXU layers: bf16 weights
            w = w.astype(jnp.bfloat16)
        flat.append(w)
        flat.append(b)
    return flat


# ---------------------------------------------------------------------------
# Kernel: full 6-layer MLP on one (features, batch_tile) slab.
# ---------------------------------------------------------------------------
def _snet_kernel(x_ref,
                 w1_ref, b1_ref, w2_ref, b2_ref, w3_ref, b3_ref,
                 w4_ref, b4_ref, w5_ref, b5_ref, w6_ref, b6_ref,
                 o_ref):
    # Layout: batch on lanes, features on sublanes -> every store is
    # lane-dense and the widest activation (64, Nb) packs full (8,128) vregs.

    # ---- layer 1: (16,3) @ (3,Nb).  K=3 would use <3% of the MXU, so it runs
    # as 3 unrolled broadcast-FMAs on the VPU in f32.
    x = x_ref[...]                                   # (3, Nb) f32
    w1 = w1_ref[...]                                 # (16, 3) f32
    acc = b1_ref[...]                                # (16, 1) f32, lane-bcast
    for j in range(D_IN):
        acc = acc + w1[:, j:j + 1] * x[j:j + 1, :]
    h = jnp.tanh(acc).astype(jnp.bfloat16)           # (16, Nb) bf16

    # ---- layers 2..5: bf16 MXU matmuls, f32 accumulation, tanh (EUP).
    def mxu_layer(w_ref, b_ref, h):
        y = jnp.dot(w_ref[...], h, preferred_element_type=jnp.float32)
        return jnp.tanh(y + b_ref[...]).astype(jnp.bfloat16)

    h = mxu_layer(w2_ref, b2_ref, h)                 # (32, Nb)
    h = mxu_layer(w3_ref, b3_ref, h)                 # (64, Nb)
    h = mxu_layer(w4_ref, b4_ref, h)                 # (32, Nb)
    h = mxu_layer(w5_ref, b5_ref, h)                 # (16, Nb)

    # ---- layer 6: also on the MXU (8-row-padded W6), no activation.
    y = jnp.dot(w6_ref[...], h, preferred_element_type=jnp.float32)
    y = y + b6_ref[...]                              # (8, Nb) f32
    o_ref[...] = y[0:D_OUT, :]                       # lane-dense store, rows 0:3


# ---------------------------------------------------------------------------
# Wrapper
# ---------------------------------------------------------------------------
def _choose_block_batch(n, cap=4096):
    """Batch (lane) tile: a multiple of 128, as large as possible (<= cap).

    Does NOT require dividing n (the wrapper pads the batch up to a whole
    number of tiles).  Prefers an even grid length (v7x dual-TC split), then
    minimal padding waste, then bigger tiles.  Never falls back to 128 for
    awkward n unless n itself is that small.
    """
    n128 = -(-n // 128) * 128
    best_bb, best_score = 128, None
    for bb in range(128, min(cap, n128) + 1, 128):
        steps = -(-n128 // bb)
        waste = steps * bb - n128
        even = 0 if (steps >= 2 and steps % 2 == 0) else 1
        score = (even, waste, -bb)
        if best_score is None or score < best_score:
            best_bb, best_score = bb, score
    return best_bb


def snet_forward(x, params, *, block_batch=None, feature_major=False):
    """S_Net forward.

    x: (N, D_in) f32 in the default (PyTorch) layout; with feature_major=True
    x is (D_in, N) and the result is (D_out, N), skipping the wrapper-side
    transposes entirely (the kernel's native layout).
    params: [(W, b)] * 6 with W (out, in), b (out,)  (PyTorch nn.Linear layout).
    """
    if feature_major:
        d_in, n = x.shape
        xt = x
    else:
        n, d_in = x.shape
        xt = x.T                                     # batch -> lanes
    d_out = params[-1][0].shape[0]

    if block_batch is None:
        block_batch = _choose_block_batch(n)
    assert block_batch % 128 == 0
    steps = -(-n // block_batch)
    n_pad = steps * block_batch                      # pad batch up to the tile
    if n_pad != n:
        xt = jnp.pad(xt, ((0, 0), (0, n_pad - n)))

    packed = pack_params(params)

    grid_spec = pltpu.PrefetchScalarGridSpec(
        num_scalar_prefetch=0,
        grid=(steps,),
        in_specs=[pl.BlockSpec((d_in, block_batch), lambda i: (0, i))] +
                 [pl.BlockSpec(p.shape, lambda i: (0, 0)) for p in packed],
        out_specs=pl.BlockSpec((d_out, block_batch), lambda i: (0, i)),
    )

    out_t = pl.pallas_call(
        _snet_kernel,
        out_shape=jax.ShapeDtypeStruct((d_out, n_pad), jnp.float32),
        grid_spec=grid_spec,
        compiler_params=pltpu.CompilerParams(
            dimension_semantics=("parallel",)),
    )(xt, *packed)

    out_t = out_t[:, :n]
    return out_t if feature_major else out_t.T


# ---------------------------------------------------------------------------
# Deterministic init matching S_Net.reset_parameters: N(0, 0.1) weights/biases.
# ---------------------------------------------------------------------------
def make_params(key, d_in=D_IN, h=H, d_out=D_OUT):
    dims = [d_in, h, 2 * h, 4 * h, 2 * h, h, d_out]
    params = []
    for li in range(6):
        key, kw, kb = jax.random.split(key, 3)
        w = 0.1 * jax.random.normal(kw, (dims[li + 1], dims[li]), dtype=jnp.float32)
        b = 0.1 * jax.random.normal(kb, (dims[li + 1],), dtype=jnp.float32)
        params.append((w, b))
    return params


def snet_reference(x, params):
    y = x
    for i, (w, b) in enumerate(params):
        y = y @ w.T + b
        if i < 5:
            y = jnp.tanh(y)
    return y


if __name__ == "__main__":
    key = jax.random.PRNGKey(0)
    key, kx = jax.random.split(key)
    params = make_params(key)

    # One nicely divisible batch (-> 2 even grid steps of 1024 lanes) and one
    # awkward batch (exercises the pad-up-to-a-whole-tile path).
    for n in (2048, 1000):
        kx, kn = jax.random.split(kx)
        x = jax.random.normal(kn, (n, D_IN), dtype=jnp.float32)

        out = jax.block_until_ready(snet_forward(x, params))
        ref = snet_reference(x, params)

        assert out.shape == (n, D_OUT)
        # bf16 MXU layers -> tolerance loosened vs the f32 reference (review).
        assert jnp.allclose(out, ref, atol=5e-2, rtol=5e-2), "mismatch vs reference"

    print("KERNEL_OK")
</pallas_src>

<mosaic_0001>
module attributes {stable_mosaic.version = 11 : i64} {
  func.func @_snet_kernel(%arg0: i32, %arg1: memref<3x1024xf32, #tpu.memory_space<vmem>>, %arg2: memref<16x3xf32, #tpu.memory_space<vmem>>, %arg3: memref<16x1xf32, #tpu.memory_space<vmem>>, %arg4: memref<32x16xbf16, #tpu.memory_space<vmem>>, %arg5: memref<32x1xf32, #tpu.memory_space<vmem>>, %arg6: memref<64x32xbf16, #tpu.memory_space<vmem>>, %arg7: memref<64x1xf32, #tpu.memory_space<vmem>>, %arg8: memref<32x64xbf16, #tpu.memory_space<vmem>>, %arg9: memref<32x1xf32, #tpu.memory_space<vmem>>, %arg10: memref<16x32xbf16, #tpu.memory_space<vmem>>, %arg11: memref<16x1xf32, #tpu.memory_space<vmem>>, %arg12: memref<8x16xbf16, #tpu.memory_space<vmem>>, %arg13: memref<8x1xf32, #tpu.memory_space<vmem>>, %arg14: memref<3x1024xf32, #tpu.memory_space<vmem>>) attributes {dimension_semantics = [#tpu.dimension_semantics<parallel>], iteration_bounds = array<i64: 2>, scalar_prefetch = 0 : i64, scratch_operands = 0 : i64, tpu.core_type = #tpu.core_type<tc>, window_params = [{transform_indices = @transform_0, window_bounds = array<i64: 3, 1024>}, {pipeline_mode = #tpu.pipeline_mode<synchronous>, transform_indices = @transform_1, window_bounds = array<i64: 16, 3>}, {pipeline_mode = #tpu.pipeline_mode<synchronous>, transform_indices = @transform_2, window_bounds = array<i64: 16, 1>}, {pipeline_mode = #tpu.pipeline_mode<synchronous>, transform_indices = @transform_3, window_bounds = array<i64: 32, 16>}, {pipeline_mode = #tpu.pipeline_mode<synchronous>, transform_indices = @transform_4, window_bounds = array<i64: 32, 1>}, {pipeline_mode = #tpu.pipeline_mode<synchronous>, transform_indices = @transform_5, window_bounds = array<i64: 64, 32>}, {pipeline_mode = #tpu.pipeline_mode<synchronous>, transform_indices = @transform_6, window_bounds = array<i64: 64, 1>}, {pipeline_mode = #tpu.pipeline_mode<synchronous>, transform_indices = @transform_7, window_bounds = array<i64: 32, 64>}, {pipeline_mode = #tpu.pipeline_mode<synchronous>, transform_indices = @transform_8, window_bounds = array<i64: 32, 1>}, {pipeline_mode = #tpu.pipeline_mode<synchronous>, transform_indices = @transform_9, window_bounds = array<i64: 16, 32>}, {pipeline_mode = #tpu.pipeline_mode<synchronous>, transform_indices = @transform_10, window_bounds = array<i64: 16, 1>}, {pipeline_mode = #tpu.pipeline_mode<synchronous>, transform_indices = @transform_11, window_bounds = array<i64: 8, 16>}, {pipeline_mode = #tpu.pipeline_mode<synchronous>, transform_indices = @transform_12, window_bounds = array<i64: 8, 1>}, {transform_indices = @transform_13, window_bounds = array<i64: 3, 1024>}]} {
    %c0 = arith.constant 0 : index
    %c0_0 = arith.constant 0 : index
    %0 = vector.load %arg1[%c0, %c0_0] : memref<3x1024xf32, #tpu.memory_space<vmem>>, vector<3x1024xf32>
    %c0_1 = arith.constant 0 : index
    %c0_2 = arith.constant 0 : index
    %1 = vector.load %arg2[%c0_1, %c0_2] : memref<16x3xf32, #tpu.memory_space<vmem>>, vector<16x3xf32>
    %c0_3 = arith.constant 0 : index
    %c0_4 = arith.constant 0 : index
    %2 = vector.load %arg3[%c0_3, %c0_4] : memref<16x1xf32, #tpu.memory_space<vmem>>, vector<16x1xf32>
    %3 = vector.extract_strided_slice %1 {offsets = [0, 0], sizes = [16, 1], strides = [1, 1]} : vector<16x3xf32> to vector<16x1xf32>
    %4 = vector.extract_strided_slice %0 {offsets = [0, 0], sizes = [1, 1024], strides = [1, 1]} : vector<3x1024xf32> to vector<1x1024xf32>
    %5 = vector.broadcast %3 : vector<16x1xf32> to vector<16x1024xf32>
    %6 = vector.broadcast %4 : vector<1x1024xf32> to vector<16x1024xf32>
    %7 = arith.mulf %5, %6 : vector<16x1024xf32>
    %8 = vector.broadcast %2 : vector<16x1xf32> to vector<16x1024xf32>
    %9 = arith.addf %8, %7 : vector<16x1024xf32>
    %10 = vector.extract_strided_slice %1 {offsets = [0, 1], sizes = [16, 1], strides = [1, 1]} : vector<16x3xf32> to vector<16x1xf32>
    %11 = vector.extract_strided_slice %0 {offsets = [1, 0], sizes = [1, 1024], strides = [1, 1]} : vector<3x1024xf32> to vector<1x1024xf32>
    %12 = vector.broadcast %10 : vector<16x1xf32> to vector<16x1024xf32>
    %13 = vector.broadcast %11 : vector<1x1024xf32> to vector<16x1024xf32>
    %14 = arith.mulf %12, %13 : vector<16x1024xf32>
    %15 = arith.addf %9, %14 : vector<16x1024xf32>
    %16 = vector.extract_strided_slice %1 {offsets = [0, 2], sizes = [16, 1], strides = [1, 1]} : vector<16x3xf32> to vector<16x1xf32>
    %17 = vector.extract_strided_slice %0 {offsets = [2, 0], sizes = [1, 1024], strides = [1, 1]} : vector<3x1024xf32> to vector<1x1024xf32>
    %18 = vector.broadcast %16 : vector<16x1xf32> to vector<16x1024xf32>
    %19 = vector.broadcast %17 : vector<1x1024xf32> to vector<16x1024xf32>
    %20 = arith.mulf %18, %19 : vector<16x1024xf32>
    %21 = arith.addf %15, %20 : vector<16x1024xf32>
    %22 = math.tanh %21 : vector<16x1024xf32>
    %23 = arith.truncf %22 : vector<16x1024xf32> to vector<16x1024xbf16>
    %c0_5 = arith.constant 0 : index
    %c0_6 = arith.constant 0 : index
    %24 = vector.load %arg4[%c0_5, %c0_6] : memref<32x16xbf16, #tpu.memory_space<vmem>>, vector<32x16xbf16>
    %cst = arith.constant dense<0.000000e+00> : vector<32x1024xf32>
    %25 = tpu.matmul %24, %23, %cst {dimension_numbers = #tpu.dot_dimension_numbers<[1], [0], [0], [1], [0, 0, 1, 1], [], []>} : vector<32x16xbf16>, vector<16x1024xbf16>, vector<32x1024xf32> -> vector<32x1024xf32>
    %c0_7 = arith.constant 0 : index
    %c0_8 = arith.constant 0 : index
    %26 = vector.load %arg5[%c0_7, %c0_8] : memref<32x1xf32, #tpu.memory_space<vmem>>, vector<32x1xf32>
    %27 = vector.broadcast %26 : vector<32x1xf32> to vector<32x1024xf32>
    %28 = arith.addf %25, %27 : vector<32x1024xf32>
    %29 = math.tanh %28 : vector<32x1024xf32>
    %30 = arith.truncf %29 : vector<32x1024xf32> to vector<32x1024xbf16>
    %c0_9 = arith.constant 0 : index
    %c0_10 = arith.constant 0 : index
    %31 = vector.load %arg6[%c0_9, %c0_10] : memref<64x32xbf16, #tpu.memory_space<vmem>>, vector<64x32xbf16>
    %cst_11 = arith.constant dense<0.000000e+00> : vector<64x1024xf32>
    %32 = tpu.matmul %31, %30, %cst_11 {dimension_numbers = #tpu.dot_dimension_numbers<[1], [0], [0], [1], [0, 0, 1, 1], [], []>} : vector<64x32xbf16>, vector<32x1024xbf16>, vector<64x1024xf32> -> vector<64x1024xf32>
    %c0_12 = arith.constant 0 : index
    %c0_13 = arith.constant 0 : index
    %33 = vector.load %arg7[%c0_12, %c0_13] : memref<64x1xf32, #tpu.memory_space<vmem>>, vector<64x1xf32>
    %34 = vector.broadcast %33 : vector<64x1xf32> to vector<64x1024xf32>
    %35 = arith.addf %32, %34 : vector<64x1024xf32>
    %36 = math.tanh %35 : vector<64x1024xf32>
    %37 = arith.truncf %36 : vector<64x1024xf32> to vector<64x1024xbf16>
    %c0_14 = arith.constant 0 : index
    %c0_15 = arith.constant 0 : index
    %38 = vector.load %arg8[%c0_14, %c0_15] : memref<32x64xbf16, #tpu.memory_space<vmem>>, vector<32x64xbf16>
    %cst_16 = arith.constant dense<0.000000e+00> : vector<32x1024xf32>
    %39 = tpu.matmul %38, %37, %cst_16 {dimension_numbers = #tpu.dot_dimension_numbers<[1], [0], [0], [1], [0, 0, 1, 1], [], []>} : vector<32x64xbf16>, vector<64x1024xbf16>, vector<32x1024xf32> -> vector<32x1024xf32>
    %c0_17 = arith.constant 0 : index
    %c0_18 = arith.constant 0 : index
    %40 = vector.load %arg9[%c0_17, %c0_18] : memref<32x1xf32, #tpu.memory_space<vmem>>, vector<32x1xf32>
    %41 = vector.broadcast %40 : vector<32x1xf32> to vector<32x1024xf32>
    %42 = arith.addf %39, %41 : vector<32x1024xf32>
    %43 = math.tanh %42 : vector<32x1024xf32>
    %44 = arith.truncf %43 : vector<32x1024xf32> to vector<32x1024xbf16>
    %c0_19 = arith.constant 0 : index
    %c0_20 = arith.constant 0 : index
    %45 = vector.load %arg10[%c0_19, %c0_20] : memref<16x32xbf16, #tpu.memory_space<vmem>>, vector<16x32xbf16>
    %cst_21 = arith.constant dense<0.000000e+00> : vector<16x1024xf32>
    %46 = tpu.matmul %45, %44, %cst_21 {dimension_numbers = #tpu.dot_dimension_numbers<[1], [0], [0], [1], [0, 0, 1, 1], [], []>} : vector<16x32xbf16>, vector<32x1024xbf16>, vector<16x1024xf32> -> vector<16x1024xf32>
    %c0_22 = arith.constant 0 : index
    %c0_23 = arith.constant 0 : index
    %47 = vector.load %arg11[%c0_22, %c0_23] : memref<16x1xf32, #tpu.memory_space<vmem>>, vector<16x1xf32>
    %48 = vector.broadcast %47 : vector<16x1xf32> to vector<16x1024xf32>
    %49 = arith.addf %46, %48 : vector<16x1024xf32>
    %50 = math.tanh %49 : vector<16x1024xf32>
    %51 = arith.truncf %50 : vector<16x1024xf32> to vector<16x1024xbf16>
    %c0_24 = arith.constant 0 : index
    %c0_25 = arith.constant 0 : index
    %52 = vector.load %arg12[%c0_24, %c0_25] : memref<8x16xbf16, #tpu.memory_space<vmem>>, vector<8x16xbf16>
    %cst_26 = arith.constant dense<0.000000e+00> : vector<8x1024xf32>
    %53 = tpu.matmul %52, %51, %cst_26 {dimension_numbers = #tpu.dot_dimension_numbers<[1], [0], [0], [1], [0, 0, 1, 1], [], []>} : vector<8x16xbf16>, vector<16x1024xbf16>, vector<8x1024xf32> -> vector<8x1024xf32>
    %c0_27 = arith.constant 0 : index
    %c0_28 = arith.constant 0 : index
    %54 = vector.load %arg13[%c0_27, %c0_28] : memref<8x1xf32, #tpu.memory_space<vmem>>, vector<8x1xf32>
    %55 = vector.broadcast %54 : vector<8x1xf32> to vector<8x1024xf32>
    %56 = arith.addf %53, %55 : vector<8x1024xf32>
    %57 = vector.extract_strided_slice %56 {offsets = [0, 0], sizes = [3, 1024], strides = [1, 1]} : vector<8x1024xf32> to vector<3x1024xf32>
    %c0_29 = arith.constant 0 : index
    %c0_30 = arith.constant 0 : index
    %58 = vector.load %arg14[%c0_29, %c0_30] : memref<3x1024xf32, #tpu.memory_space<vmem>>, vector<3x1024xf32>
    tpu.vector_store %arg14[%c0_29, %c0_30], %57 {strides = array<i32>} : memref<3x1024xf32, #tpu.memory_space<vmem>>, vector<3x1024xf32>,
    return
  }
  func.func @transform_0(%arg0: i32) -> (i32, i32) {
    %c0_i32 = arith.constant 0 : i32
    %c0_i32_0 = arith.constant 0 : i32
    return %c0_i32, %arg0 : i32, i32
  }
  func.func @transform_1(%arg0: i32) -> (i32, i32) {
    %c0_i32 = arith.constant 0 : i32
    %c0_i32_0 = arith.constant 0 : i32
    %c0_i32_1 = arith.constant 0 : i32
    return %c0_i32, %c0_i32_0 : i32, i32
  }
  func.func @transform_2(%arg0: i32) -> (i32, i32) {
    %c0_i32 = arith.constant 0 : i32
    %c0_i32_0 = arith.constant 0 : i32
    %c0_i32_1 = arith.constant 0 : i32
    return %c0_i32, %c0_i32_0 : i32, i32
  }
  func.func @transform_3(%arg0: i32) -> (i32, i32) {
    %c0_i32 = arith.constant 0 : i32
    %c0_i32_0 = arith.constant 0 : i32
    %c0_i32_1 = arith.constant 0 : i32
    return %c0_i32, %c0_i32_0 : i32, i32
  }
  func.func @transform_4(%arg0: i32) -> (i32, i32) {
    %c0_i32 = arith.constant 0 : i32
    %c0_i32_0 = arith.constant 0 : i32
    %c0_i32_1 = arith.constant 0 : i32
    return %c0_i32, %c0_i32_0 : i32, i32
  }
  func.func @transform_5(%arg0: i32) -> (i32, i32) {
    %c0_i32 = arith.constant 0 : i32
    %c0_i32_0 = arith.constant 0 : i32
    %c0_i32_1 = arith.constant 0 : i32
    return %c0_i32, %c0_i32_0 : i32, i32
  }
  func.func @transform_6(%arg0: i32) -> (i32, i32) {
    %c0_i32 = arith.constant 0 : i32
    %c0_i32_0 = arith.constant 0 : i32
    %c0_i32_1 = arith.constant 0 : i32
    return %c0_i32, %c0_i32_0 : i32, i32
  }
  func.func @transform_7(%arg0: i32) -> (i32, i32) {
    %c0_i32 = arith.constant 0 : i32
    %c0_i32_0 = arith.constant 0 : i32
    %c0_i32_1 = arith.constant 0 : i32
    return %c0_i32, %c0_i32_0 : i32, i32
  }
  func.func @transform_8(%arg0: i32) -> (i32, i32) {
    %c0_i32 = arith.constant 0 : i32
    %c0_i32_0 = arith.constant 0 : i32
    %c0_i32_1 = arith.constant 0 : i32
    return %c0_i32, %c0_i32_0 : i32, i32
  }
  func.func @transform_9(%arg0: i32) -> (i32, i32) {
    %c0_i32 = arith.constant 0 : i32
    %c0_i32_0 = arith.constant 0 : i32
    %c0_i32_1 = arith.constant 0 : i32
    return %c0_i32, %c0_i32_0 : i32, i32
  }
  func.func @transform_10(%arg0: i32) -> (i32, i32) {
    %c0_i32 = arith.constant 0 : i32
    %c0_i32_0 = arith.constant 0 : i32
    %c0_i32_1 = arith.constant 0 : i32
    return %c0_i32, %c0_i32_0 : i32, i32
  }
  func.func @transform_11(%arg0: i32) -> (i32, i32) {
    %c0_i32 = arith.constant 0 : i32
    %c0_i32_0 = arith.constant 0 : i32
    %c0_i32_1 = arith.constant 0 : i32
    return %c0_i32, %c0_i32_0 : i32, i32
  }
  func.func @transform_12(%arg0: i32) -> (i32, i32) {
    %c0_i32 = arith.constant 0 : i32
    %c0_i32_0 = arith.constant 0 : i32
    %c0_i32_1 = arith.constant 0 : i32
    return %c0_i32, %c0_i32_0 : i32, i32
  }
  func.func @transform_13(%arg0: i32) -> (i32, i32) {
    %c0_i32 = arith.constant 0 : i32
    %c0_i32_0 = arith.constant 0 : i32
    return %c0_i32, %arg0 : i32, i32
  }
}

</mosaic_0001>

<llo_original>
// kernel: tpu_custom_call.1
$region0: #{tpu_custom_call.1}
  #allocation0 [shape = 'u32[]', space=smem, size = 0x4, offset = 0x4, fixed_abs, tag = 'smem constant byte address 0x4 - core index']
  #allocation1 [shape = 'u32[72,128]{1,0:T(1,128)}', space=vmem, size = 0x9000, scoped, tag = 'internal scratch']
  %s0 = inlined_call_operand.vmem [shape: f32[3,2048], index: 0, kind: input, shape index: {}]
  %s1 = inlined_call_operand.vmem [shape: f32[16,3], index: 1, kind: input, shape index: {}]
  %s2 = inlined_call_operand.vmem [shape: f32[16,1], index: 2, kind: input, shape index: {}]
  %s3 = inlined_call_operand.vmem [shape: bf16[32,16], index: 3, kind: input, shape index: {}]
  %s4 = inlined_call_operand.vmem [shape: f32[32,1], index: 4, kind: input, shape index: {}]
  %s5 = inlined_call_operand.vmem [shape: bf16[64,32], index: 5, kind: input, shape index: {}]
  %s6 = inlined_call_operand.vmem [shape: f32[64,1], index: 6, kind: input, shape index: {}]
  %s7 = inlined_call_operand.vmem [shape: bf16[32,64], index: 7, kind: input, shape index: {}]
  %s8 = inlined_call_operand.vmem [shape: f32[32,1], index: 8, kind: input, shape index: {}]
  %s9 = inlined_call_operand.vmem [shape: bf16[16,32], index: 9, kind: input, shape index: {}]
  %s10 = inlined_call_operand.vmem [shape: f32[16,1], index: 10, kind: input, shape index: {}]
  %s11 = inlined_call_operand.vmem [shape: bf16[8,16], index: 11, kind: input, shape index: {}]
  %s12 = inlined_call_operand.vmem [shape: f32[8,1], index: 12, kind: input, shape index: {}]
  %s13 = inlined_call_operand.hbm [shape: f32[3,2048], index: 13, kind: output, shape index: {}]
  %s14 = sld [smem:[#allocation0]]
  $region85: #{tpu_custom_call.1} parent=0
    _
  %s16 = ssub.s32 1, %s14
  %s17 = scalar_select 0, %s16, %s14
  $region1: #{tpu_custom_call.1} parent=0
    #allocation2 [shape = 'u8[32768]{0}', space=vmem, size = 0x8000, scoped, tag = 'output window, operand 0']
    #allocation3 [shape = 's32[2]{0}', space=sflag, size = 0x8, scoped, tag = 'scoped memory for tpu_custom_call.1']
    %18 = vsyncpa [#allocation3], 0
    %s19 = scalar_lea.sflag [#allocation3], 1
    %20 = vsyncpa %s19, 0
    loop: start=0, step=1, limit=4
    $region2: #{tpu_custom_call.1} parent=1 // loop_pre_header
      _
    $region3: #{tpu_custom_call.1} parent=1 // loop_header
      %s22 = sphi 0, %s26
      %p23 = scmp.ge.s32.totalorder %s22, 4
      %s32 = sphi 0, %s34
      %s35 = sphi 0, %s32
      %s36 = sphi 0, %s35
      %s52 = sphi 0, %s36
      %s56 = sphi 0, %s56
      %s58 = sphi 0, %s56
      %s59 = sphi 0, %s58
      %s73 = sphi 0, %s59
      %s77 = sphi 0, %s77
      %s79 = sphi 0, %s77
      %s80 = sphi 0, %s79
      %s94 = sphi 0, %s80
      %s98 = sphi 0, %s98
      %s100 = sphi 0, %s98
      %s101 = sphi 0, %s100
      %s115 = sphi 0, %s101
      %s119 = sphi 0, %s119
      %s121 = sphi 0, %s119
      %s122 = sphi 0, %s121
      %s136 = sphi 0, %s122
      %s140 = sphi 0, %s140
      %s142 = sphi 0, %s140
      %s143 = sphi 0, %s142
      %s157 = sphi 0, %s143
      %s161 = sphi 0, %s161
      %s163 = sphi 0, %s161
      %s164 = sphi 0, %s163
      %s178 = sphi 0, %s164
      %s182 = sphi 0, %s182
      %s184 = sphi 0, %s182
      %s185 = sphi 0, %s184
      %s199 = sphi 0, %s185
      %s203 = sphi 0, %s203
      %s205 = sphi 0, %s203
      %s206 = sphi 0, %s205
      %s220 = sphi 0, %s206
      %s224 = sphi 0, %s224
      %s226 = sphi 0, %s224
      %s227 = sphi 0, %s226
      %s241 = sphi 0, %s227
      %s245 = sphi 0, %s245
      %s247 = sphi 0, %s245
      %s248 = sphi 0, %s247
      %s262 = sphi 0, %s248
      %s266 = sphi 0, %s266
      %s268 = sphi 0, %s266
      %s269 = sphi 0, %s268
      %s283 = sphi 0, %s269
      %s287 = sphi 0, %s287
      %s289 = sphi 0, %s287
      %s290 = sphi 0, %s289
      %s304 = sphi 0, %s290
      %s310 = sphi 0, %s312
      %s313 = sphi 0, %s310
      %s314 = sphi 0, %s313
      %s330 = sphi 0, %s314
    $region4: #{tpu_custom_call.1} parent=1 // loop_header_branch
      %25 = sbr.rel (%p23) target = $region8
    $region5: #{tpu_custom_call.1} parent=1 // loop_body
      %s27 = ssub.s32 %s22, 1
      %s28 = ssub.s32 %s22, 2
      %s29 = sadd.s32 %s22, 1
      %s30 = ssub.s32 %s22, %s29
      %p31 = scmp.eq.s32.totalorder %s30, 0
      %s33 = sadd.s32 %s32, 1
      %s34 = scalar_select %p31, %s32, %s33
      %p37 = pneg %p31
      %p38 = scmp.eq.s32.totalorder %s22, 1
      %p39 = por %p37, %p38
      %p40 = scmp.ne.s32.totalorder %s32, %s35
      %p41 = scmp.eq.s32.totalorder %s22, 0
      %p42 = por %p40, %p41
      %p43 = scmp.ne.s32.totalorder %s32, %s35
      %p44 = scmp.eq.s32.totalorder %s27, 1
      %p45 = por %p43, %p44
      %p46 = scmp.ne.s32.totalorder %s35, %s36
      %p47 = scmp.eq.s32.totalorder %s27, 0
      %p48 = por %p46, %p47
      %p49 = scmp.ne.s32.totalorder %s35, %s36
      %p50 = scmp.eq.s32.totalorder %s28, 1
      %p51 = por %p49, %p50
      %p53 = scmp.ne.s32.totalorder %s36, %s52
      %p54 = scmp.eq.s32.totalorder %s28, 0
      %p55 = por %p53, %p54
      %s57 = sadd.s32 %s56, 1
      %p60 = scmp.eq.s32.totalorder %s22, 1
      %p61 = scmp.ne.s32.totalorder %s56, %s58
      %p62 = scmp.eq.s32.totalorder %s22, 0
      %p63 = por %p61, %p62
      %p64 = scmp.ne.s32.totalorder %s56, %s58
      %p65 = scmp.eq.s32.totalorder %s27, 1
      %p66 = por %p64, %p65
      %p67 = scmp.ne.s32.totalorder %s58, %s59
      %p68 = scmp.eq.s32.totalorder %s27, 0
      %p69 = por %p67, %p68
      %p70 = scmp.ne.s32.totalorder %s58, %s59
      %p71 = scmp.eq.s32.totalorder %s28, 1
      %p72 = por %p70, %p71
      %p74 = scmp.ne.s32.totalorder %s59, %s73
      %p75 = scmp.eq.s32.totalorder %s28, 0
      %p76 = por %p74, %p75
      %s78 = sadd.s32 %s77, 1
      %p81 = scmp.eq.s32.totalorder %s22, 1
      %p82 = scmp.ne.s32.totalorder %s77, %s79
      %p83 = scmp.eq.s32.totalorder %s22, 0
      %p84 = por %p82, %p83
      %p85 = scmp.ne.s32.totalorder %s77, %s79
      %p86 = scmp.eq.s32.totalorder %s27, 1
      %p87 = por %p85, %p86
      %p88 = scmp.ne.s32.totalorder %s79, %s80
      %p89 = scmp.eq.s32.totalorder %s27, 0
      %p90 = por %p88, %p89
      %p91 = scmp.ne.s32.totalorder %s79, %s80
      %p92 = scmp.eq.s32.totalorder %s28, 1
      %p93 = por %p91, %p92
      %p95 = scmp.ne.s32.totalorder %s80, %s94
      %p96 = scmp.eq.s32.totalorder %s28, 0
      %p97 = por %p95, %p96
      %s99 = sadd.s32 %s98, 1
      %p102 = scmp.eq.s32.totalorder %s22, 1
      %p103 = scmp.ne.s32.totalorder %s98, %s100
      %p104 = scmp.eq.s32.totalorder %s22, 0
      %p105 = por %p103, %p104
      %p106 = scmp.ne.s32.totalorder %s98, %s100
      %p107 = scmp.eq.s32.totalorder %s27, 1
      %p108 = por %p106, %p107
      %p109 = scmp.ne.s32.totalorder %s100, %s101
      %p110 = scmp.eq.s32.totalorder %s27, 0
      %p111 = por %p109, %p110
      %p112 = scmp.ne.s32.totalorder %s100, %s101
      %p113 = scmp.eq.s32.totalorder %s28, 1
      %p114 = por %p112, %p113
      %p116 = scmp.ne.s32.totalorder %s101, %s115
      %p117 = scmp.eq.s32.totalorder %s28, 0
      %p118 = por %p116, %p117
      %s120 = sadd.s32 %s119, 1
      %p123 = scmp.eq.s32.totalorder %s22, 1
      %p124 = scmp.ne.s32.totalorder %s119, %s121
      %p125 = scmp.eq.s32.totalorder %s22, 0
      %p126 = por %p124, %p125
      %p127 = scmp.ne.s32.totalorder %s119, %s121
      %p128 = scmp.eq.s32.totalorder %s27, 1
      %p129 = por %p127, %p128
      %p130 = scmp.ne.s32.totalorder %s121, %s122
      %p131 = scmp.eq.s32.totalorder %s27, 0
      %p132 = por %p130, %p131
      %p133 = scmp.ne.s32.totalorder %s121, %s122
      %p134 = scmp.eq.s32.totalorder %s28, 1
      %p135 = por %p133, %p134
      %p137 = scmp.ne.s32.totalorder %s122, %s136
      %p138 = scmp.eq.s32.totalorder %s28, 0
      %p139 = por %p137, %p138
      %s141 = sadd.s32 %s140, 1
      %p144 = scmp.eq.s32.totalorder %s22, 1
      %p145 = scmp.ne.s32.totalorder %s140, %s142
      %p146 = scmp.eq.s32.totalorder %s22, 0
      %p147 = por %p145, %p146
      %p148 = scmp.ne.s32.totalorder %s140, %s142
      %p149 = scmp.eq.s32.totalorder %s27, 1
      %p150 = por %p148, %p149
      %p151 = scmp.ne.s32.totalorder %s142, %s143
      %p152 = scmp.eq.s32.totalorder %s27, 0
      %p153 = por %p151, %p152
      %p154 = scmp.ne.s32.totalorder %s142, %s143
      %p155 = scmp.eq.s32.totalorder %s28, 1
      %p156 = por %p154, %p155
      %p158 = scmp.ne.s32.totalorder %s143, %s157
      %p159 = scmp.eq.s32.totalorder %s28, 0
      %p160 = por %p158, %p159
      %s162 = sadd.s32 %s161, 1
      %p165 = scmp.eq.s32.totalorder %s22, 1
      %p166 = scmp.ne.s32.totalorder %s161, %s163
      %p167 = scmp.eq.s32.totalorder %s22, 0
      %p168 = por %p166, %p167
      %p169 = scmp.ne.s32.totalorder %s161, %s163
      %p170 = scmp.eq.s32.totalorder %s27, 1
      %p171 = por %p169, %p170
      %p172 = scmp.ne.s32.totalorder %s163, %s164
      %p173 = scmp.eq.s32.totalorder %s27, 0
      %p174 = por %p172, %p173
      %p175 = scmp.ne.s32.totalorder %s163, %s164
      %p176 = scmp.eq.s32.totalorder %s28, 1
      %p177 = por %p175, %p176
      %p179 = scmp.ne.s32.totalorder %s164, %s178
      %p180 = scmp.eq.s32.totalorder %s28, 0
      %p181 = por %p179, %p180
      %s183 = sadd.s32 %s182, 1
      %p186 = scmp.eq.s32.totalorder %s22, 1
      %p187 = scmp.ne.s32.totalorder %s182, %s184
      %p188 = scmp.eq.s32.totalorder %s22, 0
      %p189 = por %p187, %p188
      %p190 = scmp.ne.s32.totalorder %s182, %s184
      %p191 = scmp.eq.s32.totalorder %s27, 1
      %p192 = por %p190, %p191
      %p193 = scmp.ne.s32.totalorder %s184, %s185
      %p194 = scmp.eq.s32.totalorder %s27, 0
      %p195 = por %p193, %p194
      %p196 = scmp.ne.s32.totalorder %s184, %s185
      %p197 = scmp.eq.s32.totalorder %s28, 1
      %p198 = por %p196, %p197
      %p200 = scmp.ne.s32.totalorder %s185, %s199
      %p201 = scmp.eq.s32.totalorder %s28, 0
      %p202 = por %p200, %p201
      %s204 = sadd.s32 %s203, 1
      %p207 = scmp.eq.s32.totalorder %s22, 1
      %p208 = scmp.ne.s32.totalorder %s203, %s205
      %p209 = scmp.eq.s32.totalorder %s22, 0
      %p210 = por %p208, %p209
      %p211 = scmp.ne.s32.totalorder %s203, %s205
      %p212 = scmp.eq.s32.totalorder %s27, 1
      %p213 = por %p211, %p212
      %p214 = scmp.ne.s32.totalorder %s205, %s206
      %p215 = scmp.eq.s32.totalorder %s27, 0
      %p216 = por %p214, %p215
      %p217 = scmp.ne.s32.totalorder %s205, %s206
      %p218 = scmp.eq.s32.totalorder %s28, 1
      %p219 = por %p217, %p218
      %p221 = scmp.ne.s32.totalorder %s206, %s220
      %p222 = scmp.eq.s32.totalorder %s28, 0
      %p223 = por %p221, %p222
      %s225 = sadd.s32 %s224, 1
      %p228 = scmp.eq.s32.totalorder %s22, 1
      %p229 = scmp.ne.s32.totalorder %s224, %s226
      %p230 = scmp.eq.s32.totalorder %s22, 0
      %p231 = por %p229, %p230
      %p232 = scmp.ne.s32.totalorder %s224, %s226
      %p233 = scmp.eq.s32.totalorder %s27, 1
      %p234 = por %p232, %p233
      %p235 = scmp.ne.s32.totalorder %s226, %s227
      %p236 = scmp.eq.s32.totalorder %s27, 0
      %p237 = por %p235, %p236
      %p238 = scmp.ne.s32.totalorder %s226, %s227
      %p239 = scmp.eq.s32.totalorder %s28, 1
      %p240 = por %p238, %p239
      %p242 = scmp.ne.s32.totalorder %s227, %s241
      %p243 = scmp.eq.s32.totalorder %s28, 0
      %p244 = por %p242, %p243
      %s246 = sadd.s32 %s245, 1
      %p249 = scmp.eq.s32.totalorder %s22, 1
      %p250 = scmp.ne.s32.totalorder %s245, %s247
      %p251 = scmp.eq.s32.totalorder %s22, 0
      %p252 = por %p250, %p251
      %p253 = scmp.ne.s32.totalorder %s245, %s247
      %p254 = scmp.eq.s32.totalorder %s27, 1
      %p255 = por %p253, %p254
      %p256 = scmp.ne.s32.totalorder %s247, %s248
      %p257 = scmp.eq.s32.totalorder %s27, 0
      %p258 = por %p256, %p257
      %p259 = scmp.ne.s32.totalorder %s247, %s248
      %p260 = scmp.eq.s32.totalorder %s28, 1
      %p261 = por %p259, %p260
      %p263 = scmp.ne.s32.totalorder %s248, %s262
      %p264 = scmp.eq.s32.totalorder %s28, 0
      %p265 = por %p263, %p264
      %s267 = sadd.s32 %s266, 1
      %p270 = scmp.eq.s32.totalorder %s22, 1
      %p271 = scmp.ne.s32.totalorder %s266, %s268
      %p272 = scmp.eq.s32.totalorder %s22, 0
      %p273 = por %p271, %p272
      %p274 = scmp.ne.s32.totalorder %s266, %s268
      %p275 = scmp.eq.s32.totalorder %s27, 1
      %p276 = por %p274, %p275
      %p277 = scmp.ne.s32.totalorder %s268, %s269
      %p278 = scmp.eq.s32.totalorder %s27, 0
      %p279 = por %p277, %p278
      %p280 = scmp.ne.s32.totalorder %s268, %s269
      %p281 = scmp.eq.s32.totalorder %s28, 1
      %p282 = por %p280, %p281
      %p284 = scmp.ne.s32.totalorder %s269, %s283
      %p285 = scmp.eq.s32.totalorder %s28, 0
      %p286 = por %p284, %p285
      %s288 = sadd.s32 %s287, 1
      %p291 = scmp.eq.s32.totalorder %s22, 1
      %p292 = scmp.ne.s32.totalorder %s287, %s289
      %p293 = scmp.eq.s32.totalorder %s22, 0
      %p294 = por %p292, %p293
      %p295 = scmp.ne.s32.totalorder %s287, %s289
      %p296 = scmp.eq.s32.totalorder %s27, 1
      %p297 = por %p295, %p296
      %p298 = scmp.ne.s32.totalorder %s289, %s290
      %p299 = scmp.eq.s32.totalorder %s27, 0
      %p300 = por %p298, %p299
      %p301 = scmp.ne.s32.totalorder %s289, %s290
      %p302 = scmp.eq.s32.totalorder %s28, 1
      %p303 = por %p301, %p302
      %p305 = scmp.ne.s32.totalorder %s290, %s304
      %p306 = scmp.eq.s32.totalorder %s28, 0
      %p307 = por %p305, %p306
      %s308 = ssub.s32 %s22, %s29
      %p309 = scmp.eq.s32.totalorder %s308, 0
      %s311 = sadd.s32 %s310, 1
      %s312 = scalar_select %p309, %s310, %s311
      %p315 = pneg %p309
      %p316 = scmp.eq.s32.totalorder %s22, 1
      %p317 = por %p315, %p316
      %p318 = scmp.ne.s32.totalorder %s310, %s313
      %p319 = scmp.eq.s32.totalorder %s22, 0
      %p320 = por %p318, %p319
      %p321 = scmp.ne.s32.totalorder %s310, %s313
      %p322 = scmp.eq.s32.totalorder %s27, 1
      %p323 = por %p321, %p322
      %p324 = scmp.ne.s32.totalorder %s313, %s314
      %p325 = scmp.eq.s32.totalorder %s27, 0
      %p326 = por %p324, %p325
      %p327 = scmp.ne.s32.totalorder %s313, %s314
      %p328 = scmp.eq.s32.totalorder %s28, 1
      %p329 = por %p327, %p328
      %p331 = scmp.ne.s32.totalorder %s314, %s330
      %p332 = scmp.eq.s32.totalorder %s28, 0
      %p333 = por %p331, %p332
      %p334 = scmp.le.s32.totalorder 1, %s22
      %p335 = scmp.lt.s32.totalorder %s22, 3
      %p336 = pnand %p334, %p335
      %p337 = pneg %p336
      // Predicated region
      $region9: #{tpu_custom_call.1} parent=5 // pred_check
        _
      $region10: #{tpu_custom_call.1} parent=5 // pred_check_branch
        %339 = sbr.rel (%p336) target = $region12
      $region11: #{tpu_custom_call.1} parent=5 // pred_region
        %s340 = ssub.s32 %s22, 1
        // Predicated region
        $region13: #{tpu_custom_call.1} parent=11 // pred_check
          %p341 = pneg %p69
        $region14: #{tpu_custom_call.1} parent=11 // pred_check_branch
          %343 = sbr.rel (%p341) target = $region16
        $region15: #{tpu_custom_call.1} parent=11 // pred_region
          _
        $region16: #{tpu_custom_call.1} parent=11 // pred_fallthru
          _
        // Predicated region
        $region17: #{tpu_custom_call.1} parent=11 // pred_check
          %p344 = pneg %p90
        $region18: #{tpu_custom_call.1} parent=11 // pred_check_branch
          %346 = sbr.rel (%p344) target = $region20
        $region19: #{tpu_custom_call.1} parent=11 // pred_region
          _
        $region20: #{tpu_custom_call.1} parent=11 // pred_fallthru
          _
        // Predicated region
        $region21: #{tpu_custom_call.1} parent=11 // pred_check
          %p347 = pneg %p111
        $region22: #{tpu_custom_call.1} parent=11 // pred_check_branch
          %349 = sbr.rel (%p347) target = $region24
        $region23: #{tpu_custom_call.1} parent=11 // pred_region
          _
        $region24: #{tpu_custom_call.1} parent=11 // pred_fallthru
          _
        // Predicated region
        $region25: #{tpu_custom_call.1} parent=11 // pred_check
          %p350 = pneg %p132
        $region26: #{tpu_custom_call.1} parent=11 // pred_check_branch
          %352 = sbr.rel (%p350) target = $region28
        $region27: #{tpu_custom_call.1} parent=11 // pred_region
          _
        $region28: #{tpu_custom_call.1} parent=11 // pred_fallthru
          _
        // Predicated region
        $region29: #{tpu_custom_call.1} parent=11 // pred_check
          %p353 = pneg %p153
        $region30: #{tpu_custom_call.1} parent=11 // pred_check_branch
          %355 = sbr.rel (%p353) target = $region32
        $region31: #{tpu_custom_call.1} parent=11 // pred_region
          _
        $region32: #{tpu_custom_call.1} parent=11 // pred_fallthru
          _
        // Predicated region
        $region33: #{tpu_custom_call.1} parent=11 // pred_check
          %p356 = pneg %p174
        $region34: #{tpu_custom_call.1} parent=11 // pred_check_branch
          %358 = sbr.rel (%p356) target = $region36
        $region35: #{tpu_custom_call.1} parent=11 // pred_region
          _
        $region36: #{tpu_custom_call.1} parent=11 // pred_fallthru
          _
        // Predicated region
        $region37: #{tpu_custom_call.1} parent=11 // pred_check
          %p359 = pneg %p195
        $region38: #{tpu_custom_call.1} parent=11 // pred_check_branch
          %361 = sbr.rel (%p359) target = $region40
        $region39: #{tpu_custom_call.1} parent=11 // pred_region
          _
        $region40: #{tpu_custom_call.1} parent=11 // pred_fallthru
          _
        // Predicated region
        $region41: #{tpu_custom_call.1} parent=11 // pred_check
          %p362 = pneg %p216
        $region42: #{tpu_custom_call.1} parent=11 // pred_check_branch
          %364 = sbr.rel (%p362) target = $region44
        $region43: #{tpu_custom_call.1} parent=11 // pred_region
          _
        $region44: #{tpu_custom_call.1} parent=11 // pred_fallthru
          _
        // Predicated region
        $region45: #{tpu_custom_call.1} parent=11 // pred_check
          %p365 = pneg %p237
        $region46: #{tpu_custom_call.1} parent=11 // pred_check_branch
          %367 = sbr.rel (%p365) target = $region48
        $region47: #{tpu_custom_call.1} parent=11 // pred_region
          _
        $region48: #{tpu_custom_call.1} parent=11 // pred_fallthru
          _
        // Predicated region
        $region49: #{tpu_custom_call.1} parent=11 // pred_check
          %p368 = pneg %p258
        $region50: #{tpu_custom_call.1} parent=11 // pred_check_branch
          %370 = sbr.rel (%p368) target = $region52
        $region51: #{tpu_custom_call.1} parent=11 // pred_region
          _
        $region52: #{tpu_custom_call.1} parent=11 // pred_fallthru
          _
        // Predicated region
        $region53: #{tpu_custom_call.1} parent=11 // pred_check
          %p371 = pneg %p279
        $region54: #{tpu_custom_call.1} parent=11 // pred_check_branch
          %373 = sbr.rel (%p371) target = $region56
        $region55: #{tpu_custom_call.1} parent=11 // pred_region
          _
        $region56: #{tpu_custom_call.1} parent=11 // pred_fallthru
          _
        // Predicated region
        $region57: #{tpu_custom_call.1} parent=11 // pred_check
          %p374 = pneg %p300
        $region58: #{tpu_custom_call.1} parent=11 // pred_check_branch
          %376 = sbr.rel (%p374) target = $region60
        $region59: #{tpu_custom_call.1} parent=11 // pred_region
          _
        $region60: #{tpu_custom_call.1} parent=11 // pred_fallthru
          _
      $region12: #{tpu_custom_call.1} parent=5 // pred_fallthru
        _
      %p377 = scmp.lt.s32.totalorder %s22, 2
      // Predicated region
      $region61: #{tpu_custom_call.1} parent=5 // pred_check
        %p378 = pneg %p377
      $region62: #{tpu_custom_call.1} parent=5 // pred_check_branch
        %380 = sbr.rel (%p378) target = $region64
      $region63: #{tpu_custom_call.1} parent=5 // pred_region
        // Predicated region
        $region65: #{tpu_custom_call.1} parent=63 // pred_check
          %p381 = pneg %p42
        $region66: #{tpu_custom_call.1} parent=63 // pred_check_branch
          %383 = sbr.rel (%p381) target = $region68
        $region67: #{tpu_custom_call.1} parent=63 // pred_region
          %s384 = smul.u32 8, %s22
          %p385 = scmp.lt.s32.totalorder %s384, 15
          %s386 = scalar_select %p385, %s384, 15
          %s387 = smul.addr %s386, 4
          %s388 = scalar_lea.vmem %s0, %s387
          %s389 = smul.u32 8, %s22
        $region68: #{tpu_custom_call.1} parent=63 // pred_fallthru
          _
      $region64: #{tpu_custom_call.1} parent=5 // pred_fallthru
        _
      %p390 = scmp.le.s32.totalorder 1, %s22
      %p391 = scmp.lt.s32.totalorder %s22, 3
      %p392 = pnand %p390, %p391
      %p393 = pneg %p392
      // Predicated region
      $region69: #{tpu_custom_call.1} parent=5 // pred_check
        _
      $region70: #{tpu_custom_call.1} parent=5 // pred_check_branch
        %395 = sbr.rel (%p392) target = $region72
      $region71: #{tpu_custom_call.1} parent=5 // pred_region
        %s396 = ssub.s32 %s22, 1
        %s397 = smul.u32 8, %s27
        %p398 = scmp.lt.s32.totalorder %s397, 15
        %s399 = scalar_select %p398, %s397, 15
        %s400 = smul.addr %s399, 4
        %s401 = scalar_lea.vmem %s0, %s400
        %p402 = pneg %p48
        %p403 = pneg %p45
        %p404 = pneg %p69
        %p405 = pneg %p66
        %p406 = pneg %p90
        %p407 = pneg %p87
        %p408 = pneg %p111
        %p409 = pneg %p108
        %p410 = pneg %p132
        %p411 = pneg %p129
        %p412 = pneg %p153
        %p413 = pneg %p150
        %p414 = pneg %p174
        %p415 = pneg %p171
        %p416 = pneg %p195
        %p417 = pneg %p192
        %p418 = pneg %p216
        %p419 = pneg %p213
        %p420 = pneg %p237
        %p421 = pneg %p234
        %p422 = pneg %p258
        %p423 = pneg %p255
        %p424 = pneg %p279
        %p425 = pneg %p276
        %p426 = pneg %p300
        %p427 = pneg %p297
        %p428 = pneg %p326
        %p429 = pneg %p323
        %s430 = sand.u32 %s313, 1
        %s431 = scalar_lea.sflag [#allocation3], %s430
        %s432 = sand.u32 %s313, 1
        %s433 = smul.addr %s432, 32
        %s434 = scalar_lea.vmem [#allocation2], %s433
        %s435 = smul.u32 8, %s27
        %p436 = scmp.lt.s32.totalorder %s435, 15
        %s437 = scalar_select %p436, %s435, 15
        %s438 = smul.addr %s437, 4
        %s439 = scalar_lea.vmem %s0, %s438
        %s440 = smul.u32 8, %s27
        %s441 = smul.u32 8, %s27
        %v443 = vld [vmem:[%s439] sm:$0x77]
        %v444 = vld [vmem:[%s439 + $0x8] sm:$0x77]
        %v445 = vld [vmem:[%s439 + $0x10] sm:$0x77]
        %v446 = vld [vmem:[%s439 + $0x18] sm:$0x77]
        %v447 = vld [vmem:[%s1] sm:$0xff]
        %v448 = vld [vmem:[%s1 + $0x8] sm:$0xff]
        %v449 = vld [vmem:[%s2] sm:$0xff]
        %v450 = vld [vmem:[%s2 + $0x8] sm:$0xff]
        %452 = vset.pattern.permute.xlu0 0
        %453 = vperm.xlu0 %452, %v447
        %v454 = vpop.permute.xlu0 %453
        %457 = vset.pattern.permute.xlu0 0
        %458 = vperm.xlu0 %457, %v448
        %v459 = vpop.permute.xlu0 %458
        %v465 = vperm.slane %v443, 0
        %v466 = vperm.slane %v443, 4
        %v467 = vperm.slane %v444, 0
        %v468 = vperm.slane %v444, 4
        %v469 = vperm.slane %v445, 0
        %v470 = vperm.slane %v445, 4
        %v471 = vperm.slane %v446, 0
        %v472 = vperm.slane %v446, 4
        %v481 = vperm.slane %v465, 0
        %v482 = vperm.slane %v466, 0
        %v483 = vperm.slane %v467, 0
        %v484 = vperm.slane %v468, 0
        %v485 = vperm.slane %v469, 0
        %v486 = vperm.slane %v470, 0
        %v487 = vperm.slane %v471, 0
        %v488 = vperm.slane %v472, 0
        %v489 = vmul.f32 %v454, %v481
        %v490 = vmul.f32 %v454, %v482
        %v491 = vmul.f32 %v454, %v483
        %v492 = vmul.f32 %v454, %v484
        %v493 = vmul.f32 %v454, %v485
        %v494 = vmul.f32 %v454, %v486
        %v495 = vmul.f32 %v454, %v487
        %v496 = vmul.f32 %v454, %v488
        %v497 = vmul.f32 %v459, %v481
        %v498 = vmul.f32 %v459, %v482
        %v499 = vmul.f32 %v459, %v483
        %v500 = vmul.f32 %v459, %v484
        %v501 = vmul.f32 %v459, %v485
        %v502 = vmul.f32 %v459, %v486
        %v503 = vmul.f32 %v459, %v487
        %v504 = vmul.f32 %v459, %v488
        %506 = vset.pattern.permute.xlu0 0
        %507 = vperm.xlu0 %506, %v449
        %v508 = vpop.permute.xlu0 %507
        %511 = vset.pattern.permute.xlu0 0
        %512 = vperm.xlu0 %511, %v450
        %v513 = vpop.permute.xlu0 %512
        %v515 = vadd.f32 %v508, %v489
        %v516 = vadd.f32 %v508, %v490
        %v517 = vadd.f32 %v508, %v491
        %v518 = vadd.f32 %v508, %v492
        %v519 = vadd.f32 %v508, %v493
        %v520 = vadd.f32 %v508, %v494
        %v521 = vadd.f32 %v508, %v495
        %v522 = vadd.f32 %v508, %v496
        %v523 = vadd.f32 %v513, %v497
        %v524 = vadd.f32 %v513, %v498
        %v525 = vadd.f32 %v513, %v499
        %v526 = vadd.f32 %v513, %v500
        %v527 = vadd.f32 %v513, %v501
        %v528 = vadd.f32 %v513, %v502
        %v529 = vadd.f32 %v513, %v503
        %v530 = vadd.f32 %v513, %v504
        %531 = vset.pattern.permute.xlu0 1
        %532 = vperm.xlu0 %531, %v447
        %v533 = vpop.permute.xlu0 %532
        %535 = vset.pattern.permute.xlu0 1
        %536 = vperm.xlu0 %535, %v448
        %v537 = vpop.permute.xlu0 %536
        %v539 = vperm.slane %v443, 1
        %v540 = vperm.slane %v443, 5
        %v541 = vperm.slane %v444, 1
        %v542 = vperm.slane %v444, 5
        %v543 = vperm.slane %v445, 1
        %v544 = vperm.slane %v445, 5
        %v545 = vperm.slane %v446, 1
        %v546 = vperm.slane %v446, 5
        %v555 = vperm.slane %v539, 1
        %v556 = vperm.slane %v540, 1
        %v557 = vperm.slane %v541, 1
        %v558 = vperm.slane %v542, 1
        %v559 = vperm.slane %v543, 1
        %v560 = vperm.slane %v544, 1
        %v561 = vperm.slane %v545, 1
        %v562 = vperm.slane %v546, 1
        %v563 = vmul.f32 %v533, %v555
        %v564 = vmul.f32 %v533, %v556
        %v565 = vmul.f32 %v533, %v557
        %v566 = vmul.f32 %v533, %v558
        %v567 = vmul.f32 %v533, %v559
        %v568 = vmul.f32 %v533, %v560
        %v569 = vmul.f32 %v533, %v561
        %v570 = vmul.f32 %v533, %v562
        %v571 = vmul.f32 %v537, %v555
        %v572 = vmul.f32 %v537, %v556
        %v573 = vmul.f32 %v537, %v557
        %v574 = vmul.f32 %v537, %v558
        %v575 = vmul.f32 %v537, %v559
        %v576 = vmul.f32 %v537, %v560
        %v577 = vmul.f32 %v537, %v561
        %v578 = vmul.f32 %v537, %v562
        %v579 = vadd.f32 %v515, %v563
        %v580 = vadd.f32 %v516, %v564
        %v581 = vadd.f32 %v517, %v565
        %v582 = vadd.f32 %v518, %v566
        %v583 = vadd.f32 %v519, %v567
        %v584 = vadd.f32 %v520, %v568
        %v585 = vadd.f32 %v521, %v569
        %v586 = vadd.f32 %v522, %v570
        %v587 = vadd.f32 %v523, %v571
        %v588 = vadd.f32 %v524, %v572
        %v589 = vadd.f32 %v525, %v573
        %v590 = vadd.f32 %v526, %v574
        %v591 = vadd.f32 %v527, %v575
        %v592 = vadd.f32 %v528, %v576
        %v593 = vadd.f32 %v529, %v577
        %v594 = vadd.f32 %v530, %v578
        %595 = vset.pattern.permute.xlu0 2
        %596 = vperm.xlu0 %595, %v447
        %v597 = vpop.permute.xlu0 %596
        %599 = vset.pattern.permute.xlu0 2
        %600 = vperm.xlu0 %599, %v448
        %v601 = vpop.permute.xlu0 %600
        %v603 = vperm.slane %v443, 2
        %v604 = vperm.slane %v443, 6
        %v605 = vperm.slane %v444, 2
        %v606 = vperm.slane %v444, 6
        %v607 = vperm.slane %v445, 2
        %v608 = vperm.slane %v445, 6
        %v609 = vperm.slane %v446, 2
        %v610 = vperm.slane %v446, 6
        %v619 = vperm.slane %v603, 2
        %v620 = vperm.slane %v604, 2
        %v621 = vperm.slane %v605, 2
        %v622 = vperm.slane %v606, 2
        %v623 = vperm.slane %v607, 2
        %v624 = vperm.slane %v608, 2
        %v625 = vperm.slane %v609, 2
        %v626 = vperm.slane %v610, 2
        %v627 = vmul.f32 %v597, %v619
        %v628 = vmul.f32 %v597, %v620
        %v629 = vmul.f32 %v597, %v621
        %v630 = vmul.f32 %v597, %v622
        %v631 = vmul.f32 %v597, %v623
        %v632 = vmul.f32 %v597, %v624
        %v633 = vmul.f32 %v597, %v625
        %v634 = vmul.f32 %v597, %v626
        %v635 = vmul.f32 %v601, %v619
        %v636 = vmul.f32 %v601, %v620
        %v637 = vmul.f32 %v601, %v621
        %v638 = vmul.f32 %v601, %v622
        %v639 = vmul.f32 %v601, %v623
        %v640 = vmul.f32 %v601, %v624
        %v641 = vmul.f32 %v601, %v625
        %v642 = vmul.f32 %v601, %v626
        %v643 = vadd.f32 %v579, %v627
        %v644 = vadd.f32 %v580, %v628
        %v645 = vadd.f32 %v581, %v629
        %v646 = vadd.f32 %v582, %v630
        %v647 = vadd.f32 %v583, %v631
        %v648 = vadd.f32 %v584, %v632
        %v649 = vadd.f32 %v585, %v633
        %v650 = vadd.f32 %v586, %v634
        %v651 = vadd.f32 %v587, %v635
        %v652 = vadd.f32 %v588, %v636
        %v653 = vadd.f32 %v589, %v637
        %v654 = vadd.f32 %v590, %v638
        %v655 = vadd.f32 %v591, %v639
        %v656 = vadd.f32 %v592, %v640
        %v657 = vadd.f32 %v593, %v641
        %v658 = vadd.f32 %v594, %v642
        %v659 = vtanh.pop %v643
        %v660 = vtanh.pop %v644
        %v661 = vtanh.pop %v645
        %v662 = vtanh.pop %v646
        %v663 = vtanh.pop %v647
        %v664 = vtanh.pop %v648
        %v665 = vtanh.pop %v649
        %v666 = vtanh.pop %v650
        %v667 = vtanh.pop %v651
        %v668 = vtanh.pop %v652
        %v669 = vtanh.pop %v653
        %v670 = vtanh.pop %v654
        %v671 = vtanh.pop %v655
        %v672 = vtanh.pop %v656
        %v673 = vtanh.pop %v657
        %v674 = vtanh.pop %v658
        %v675 = vpack.c.bf16 %v667, %v659
        %v676 = vpack.c.bf16 %v668, %v660
        %v677 = vpack.c.bf16 %v669, %v661
        %v678 = vpack.c.bf16 %v670, %v662
        %v679 = vpack.c.bf16 %v671, %v663
        %v680 = vpack.c.bf16 %v672, %v664
        %v681 = vpack.c.bf16 %v673, %v665
        %v682 = vpack.c.bf16 %v674, %v666
        %v683 = vld [vmem:[%s3] sm:$0xf]
        %v684 = vld [vmem:[%s3 + $0x4] sm:$0xf]
        %v685 = vld [vmem:[%s3 + $0x8] sm:$0xf]
        %v686 = vld [vmem:[%s3 + $0xc] sm:$0xf]
        %v687 = vld [vmem:[%s4] sm:$0xff]
        %v688 = vld [vmem:[%s4 + $0x8] sm:$0xff]
        %v689 = vld [vmem:[%s4 + $0x10] sm:$0xff]
        %v690 = vld [vmem:[%s4 + $0x18] sm:$0xff]
        %692 = vset.pattern.permute.xlu0 0
        %693 = vperm.xlu0 %692, %v687
        %v694 = vpop.permute.xlu0 %693
        %697 = vset.pattern.permute.xlu0 0
        %698 = vperm.xlu0 %697, %v688
        %v699 = vpop.permute.xlu0 %698
        %702 = vset.pattern.permute.xlu0 0
        %703 = vperm.xlu0 %702, %v689
        %v704 = vpop.permute.xlu0 %703
        %707 = vset.pattern.permute.xlu0 0
        %708 = vperm.xlu0 %707, %v690
        %v709 = vpop.permute.xlu0 %708
        %v715 = vunpack.c.l.b16 %v683
        %v716 = vunpack.c.l.b16 %v684
        %v717 = vunpack.c.l.b16 %v685
        %v718 = vunpack.c.l.b16 %v686
        %v719 = vpack.c.b16 %v716, %v715
        %v720 = vpack.c.b16 %v718, %v717
        %vm721 = vcmask 130048
        %v723 = vsel %vm721, %v719, 0
        %v726 = vsel %vm721, %v720, 0
        %728 = vmatpush.bf16.msra.mxu0 0
        %729 = vmatpush.bf16.msra.mxu0 0
        %730 = vmatpush.bf16.msra.mxu0 0
        %731 = vmatpush.bf16.msra.mxu0 0
        %732 = vmatpush.bf16.msra.mxu0 0
        %733 = vmatpush.bf16.msra.mxu0 0
        %734 = vmatpush.bf16.msra.mxu0 0
        %735 = vmatpush.bf16.msra.mxu0 %v675
        %736 = vmatmul.bf16.gmra.mxu0 %v723
        %v737 = vpop.f32.mrf.mxu0
        %v738 = vadd.f32 %v694, %v737
        %v739 = vpop.f32.mrf.mxu0
        %v740 = vadd.f32 %v699, %v739
        %741 = vmatmul.bf16.gmra.mxu0 %v726
        %v742 = vpop.f32.mrf.mxu0
        %v743 = vadd.f32 %v704, %v742
        %v744 = vpop.f32.mrf.mxu0
        %v745 = vadd.f32 %v709, %v744
        %746 = vdwg.mxu0
        %747 = vmatpush.bf16.msra.mxu0 0
        %748 = vmatpush.bf16.msra.mxu0 0
        %749 = vmatpush.bf16.msra.mxu0 0
        %750 = vmatpush.bf16.msra.mxu0 0
        %751 = vmatpush.bf16.msra.mxu0 0
        %752 = vmatpush.bf16.msra.mxu0 0
        %753 = vmatpush.bf16.msra.mxu0 0
        %754 = vmatpush.bf16.msra.mxu0 %v676
        %755 = vmatmul.bf16.gmra.mxu0 %v723
        %v756 = vpop.f32.mrf.mxu0
        %v757 = vadd.f32 %v694, %v756
        %v758 = vpop.f32.mrf.mxu0
        %v759 = vadd.f32 %v699, %v758
        %760 = vmatmul.bf16.gmra.mxu0 %v726
        %v761 = vpop.f32.mrf.mxu0
        %v762 = vadd.f32 %v704, %v761
        %v763 = vpop.f32.mrf.mxu0
        %v764 = vadd.f32 %v709, %v763
        %765 = vdwg.mxu0
        %766 = vmatpush.bf16.msra.mxu0 0
        %767 = vmatpush.bf16.msra.mxu0 0
        %768 = vmatpush.bf16.msra.mxu0 0
        %769 = vmatpush.bf16.msra.mxu0 0
        %770 = vmatpush.bf16.msra.mxu0 0
        %771 = vmatpush.bf16.msra.mxu0 0
        %772 = vmatpush.bf16.msra.mxu0 0
        %773 = vmatpush.bf16.msra.mxu0 %v677
        %774 = vmatmul.bf16.gmra.mxu0 %v723
        %v775 = vpop.f32.mrf.mxu0
        %v776 = vadd.f32 %v694, %v775
        %v777 = vpop.f32.mrf.mxu0
        %v778 = vadd.f32 %v699, %v777
        %779 = vmatmul.bf16.gmra.mxu0 %v726
        %v780 = vpop.f32.mrf.mxu0
        %v781 = vadd.f32 %v704, %v780
        %v782 = vpop.f32.mrf.mxu0
        %v783 = vadd.f32 %v709, %v782
        %784 = vdwg.mxu0
        %785 = vmatpush.bf16.msra.mxu0 0
        %786 = vmatpush.bf16.msra.mxu0 0
        %787 = vmatpush.bf16.msra.mxu0 0
        %788 = vmatpush.bf16.msra.mxu0 0
        %789 = vmatpush.bf16.msra.mxu0 0
        %790 = vmatpush.bf16.msra.mxu0 0
        %791 = vmatpush.bf16.msra.mxu0 0
        %792 = vmatpush.bf16.msra.mxu0 %v678
        %793 = vmatmul.bf16.gmra.mxu0 %v723
        %v794 = vpop.f32.mrf.mxu0
        %v795 = vadd.f32 %v694, %v794
        %v796 = vpop.f32.mrf.mxu0
        %v797 = vadd.f32 %v699, %v796
        %798 = vmatmul.bf16.gmra.mxu0 %v726
        %v799 = vpop.f32.mrf.mxu0
        %v800 = vadd.f32 %v704, %v799
        %v801 = vpop.f32.mrf.mxu0
        %v802 = vadd.f32 %v709, %v801
        %803 = vdwg.mxu0
        %804 = vmatpush.bf16.msra.mxu0 0
        %805 = vmatpush.bf16.msra.mxu0 0
        %806 = vmatpush.bf16.msra.mxu0 0
        %807 = vmatpush.bf16.msra.mxu0 0
        %808 = vmatpush.bf16.msra.mxu0 0
        %809 = vmatpush.bf16.msra.mxu0 0
        %810 = vmatpush.bf16.msra.mxu0 0
        %811 = vmatpush.bf16.msra.mxu0 %v679
        %812 = vmatmul.bf16.gmra.mxu0 %v723
        %v813 = vpop.f32.mrf.mxu0
        %v814 = vadd.f32 %v694, %v813
        %v815 = vpop.f32.mrf.mxu0
        %v816 = vadd.f32 %v699, %v815
        %817 = vmatmul.bf16.gmra.mxu0 %v726
        %v818 = vpop.f32.mrf.mxu0
        %v819 = vadd.f32 %v704, %v818
        %v820 = vpop.f32.mrf.mxu0
        %v821 = vadd.f32 %v709, %v820
        %822 = vdwg.mxu0
        %823 = vmatpush.bf16.msra.mxu0 0
        %824 = vmatpush.bf16.msra.mxu0 0
        %825 = vmatpush.bf16.msra.mxu0 0
        %826 = vmatpush.bf16.msra.mxu0 0
        %827 = vmatpush.bf16.msra.mxu0 0
        %828 = vmatpush.bf16.msra.mxu0 0
        %829 = vmatpush.bf16.msra.mxu0 0
        %830 = vmatpush.bf16.msra.mxu0 %v680
        %831 = vmatmul.bf16.gmra.mxu0 %v723
        %v832 = vpop.f32.mrf.mxu0
        %v833 = vadd.f32 %v694, %v832
        %v834 = vpop.f32.mrf.mxu0
        %v835 = vadd.f32 %v699, %v834
        %836 = vmatmul.bf16.gmra.mxu0 %v726
        %v837 = vpop.f32.mrf.mxu0
        %v838 = vadd.f32 %v704, %v837
        %v839 = vpop.f32.mrf.mxu0
        %v840 = vadd.f32 %v709, %v839
        %841 = vdwg.mxu0
        %842 = vmatpush.bf16.msra.mxu0 0
        %843 = vmatpush.bf16.msra.mxu0 0
        %844 = vmatpush.bf16.msra.mxu0 0
        %845 = vmatpush.bf16.msra.mxu0 0
        %846 = vmatpush.bf16.msra.mxu0 0
        %847 = vmatpush.bf16.msra.mxu0 0
        %848 = vmatpush.bf16.msra.mxu0 0
        %849 = vmatpush.bf16.msra.mxu0 %v681
        %850 = vmatmul.bf16.gmra.mxu0 %v723
        %v851 = vpop.f32.mrf.mxu0
        %v852 = vadd.f32 %v694, %v851
        %v853 = vpop.f32.mrf.mxu0
        %v854 = vadd.f32 %v699, %v853
        %855 = vmatmul.bf16.gmra.mxu0 %v726
        %v856 = vpop.f32.mrf.mxu0
        %v857 = vadd.f32 %v704, %v856
        %v858 = vpop.f32.mrf.mxu0
        %v859 = vadd.f32 %v709, %v858
        %860 = vdwg.mxu0
        %861 = vmatpush.bf16.msra.mxu0 0
        %862 = vmatpush.bf16.msra.mxu0 0
        %863 = vmatpush.bf16.msra.mxu0 0
        %864 = vmatpush.bf16.msra.mxu0 0
        %865 = vmatpush.bf16.msra.mxu0 0
        %866 = vmatpush.bf16.msra.mxu0 0
        %867 = vmatpush.bf16.msra.mxu0 0
        %868 = vmatpush.bf16.msra.mxu0 %v682
        %869 = vmatmul.bf16.gmra.mxu0 %v723
        %v870 = vpop.f32.mrf.mxu0
        %v871 = vadd.f32 %v694, %v870
        %v872 = vpop.f32.mrf.mxu0
        %v873 = vadd.f32 %v699, %v872
        %874 = vmatmul.bf16.gmra.mxu0 %v726
        %v875 = vpop.f32.mrf.mxu0
        %v876 = vadd.f32 %v704, %v875
        %v877 = vpop.f32.mrf.mxu0
        %v878 = vadd.f32 %v709, %v877
        %879 = vdwg.mxu0
        %v880 = vtanh.pop %v738
        %v881 = vtanh.pop %v757
        %v882 = vtanh.pop %v776
        %v883 = vtanh.pop %v795
        %v884 = vtanh.pop %v814
        %v885 = vtanh.pop %v833
        %v886 = vtanh.pop %v852
        %v887 = vtanh.pop %v871
        %v888 = vtanh.pop %v740
        %v889 = vtanh.pop %v759
        %v890 = vtanh.pop %v778
        %v891 = vtanh.pop %v797
        %v892 = vtanh.pop %v816
        %v893 = vtanh.pop %v835
        %v894 = vtanh.pop %v854
        %v895 = vtanh.pop %v873
        %v896 = vtanh.pop %v743
        %v897 = vtanh.pop %v762
        %v898 = vtanh.pop %v781
        %v899 = vtanh.pop %v800
        %v900 = vtanh.pop %v819
        %v901 = vtanh.pop %v838
        %v902 = vtanh.pop %v857
        %v903 = vtanh.pop %v876
        %v904 = vtanh.pop %v745
        %v905 = vtanh.pop %v764
        %v906 = vtanh.pop %v783
        %v907 = vtanh.pop %v802
        %v908 = vtanh.pop %v821
        %v909 = vtanh.pop %v840
        %v910 = vtanh.pop %v859
        %v911 = vtanh.pop %v878
        %v912 = vpack.c.bf16 %v888, %v880
        %v913 = vpack.c.bf16 %v889, %v881
        %v914 = vpack.c.bf16 %v890, %v882
        %v915 = vpack.c.bf16 %v891, %v883
        %v916 = vpack.c.bf16 %v892, %v884
        %v917 = vpack.c.bf16 %v893, %v885
        %v918 = vpack.c.bf16 %v894, %v886
        %v919 = vpack.c.bf16 %v895, %v887
        %v920 = vpack.c.bf16 %v904, %v896
        %v921 = vpack.c.bf16 %v905, %v897
        %v922 = vpack.c.bf16 %v906, %v898
        %v923 = vpack.c.bf16 %v907, %v899
        %v924 = vpack.c.bf16 %v908, %v900
        %v925 = vpack.c.bf16 %v909, %v901
        %v926 = vpack.c.bf16 %v910, %v902
        %v927 = vpack.c.bf16 %v911, %v903
        %v928 = vld [vmem:[%s5] sm:$0xf]
        %v929 = vld [vmem:[%s5 + $0x4] sm:$0xf]
        %v930 = vld [vmem:[%s5 + $0x8] sm:$0xf]
        %v931 = vld [vmem:[%s5 + $0xc] sm:$0xf]
        %v932 = vld [vmem:[%s5 + $0x10] sm:$0xf]
        %v933 = vld [vmem:[%s5 + $0x14] sm:$0xf]
        %v934 = vld [vmem:[%s5 + $0x18] sm:$0xf]
        %v935 = vld [vmem:[%s5 + $0x1c] sm:$0xf]
        %v936 = vld [vmem:[%s6] sm:$0xff]
        %v937 = vld [vmem:[%s6 + $0x8] sm:$0xff]
        %v938 = vld [vmem:[%s6 + $0x10] sm:$0xff]
        %v939 = vld [vmem:[%s6 + $0x18] sm:$0xff]
        %v940 = vld [vmem:[%s6 + $0x20] sm:$0xff]
        %v941 = vld [vmem:[%s6 + $0x28] sm:$0xff]
        %v942 = vld [vmem:[%s6 + $0x30] sm:$0xff]
        %v943 = vld [vmem:[%s6 + $0x38] sm:$0xff]
        %945 = vset.pattern.permute.xlu0 0
        %946 = vperm.xlu0 %945, %v936
        %v947 = vpop.permute.xlu0 %946
        %950 = vset.pattern.permute.xlu0 0
        %951 = vperm.xlu0 %950, %v937
        %v952 = vpop.permute.xlu0 %951
        %955 = vset.pattern.permute.xlu0 0
        %956 = vperm.xlu0 %955, %v938
        %v957 = vpop.permute.xlu0 %956
        %960 = vset.pattern.permute.xlu0 0
        %961 = vperm.xlu0 %960, %v939
        %v962 = vpop.permute.xlu0 %961
        %965 = vset.pattern.permute.xlu0 0
        %966 = vperm.xlu0 %965, %v940
        %v967 = vpop.permute.xlu0 %966
        %970 = vset.pattern.permute.xlu0 0
        %971 = vperm.xlu0 %970, %v941
        %v972 = vpop.permute.xlu0 %971
        %975 = vset.pattern.permute.xlu0 0
        %976 = vperm.xlu0 %975, %v942
        %v977 = vpop.permute.xlu0 %976
        %980 = vset.pattern.permute.xlu0 0
        %981 = vperm.xlu0 %980, %v943
        %v982 = vpop.permute.xlu0 %981
        %v992 = vunpack.c.l.b16 %v928
        %v993 = vunpack.c.l.b16 %v929
        %v994 = vunpack.c.l.b16 %v930
        %v995 = vunpack.c.l.b16 %v931
        %v996 = vunpack.c.l.b16 %v932
        %v997 = vunpack.c.l.b16 %v933
        %v998 = vunpack.c.l.b16 %v934
        %v999 = vunpack.c.l.b16 %v935
        %v1000 = vpack.c.b16 %v993, %v992
        %v1001 = vpack.c.b16 %v995, %v994
        %v1002 = vpack.c.b16 %v997, %v996
        %v1003 = vpack.c.b16 %v999, %v998
        %vm1004 = vcmask 261120
        %v1006 = vsel %vm1004, %v1000, 0
        %v1009 = vsel %vm1004, %v1001, 0
        %v1012 = vsel %vm1004, %v1002, 0
        %v1015 = vsel %vm1004, %v1003, 0
        %1017 = vmatpush.bf16.msra.mxu0 0
        %1018 = vmatpush.bf16.msra.mxu0 0
        %1019 = vmatpush.bf16.msra.mxu0 0
        %1020 = vmatpush.bf16.msra.mxu0 0
        %1021 = vmatpush.bf16.msra.mxu0 0
        %1022 = vmatpush.bf16.msra.mxu0 0
        %1023 = vmatpush.bf16.msra.mxu0 %v920
        %1024 = vmatpush.bf16.msra.mxu0 %v912
        %1025 = vmatmul.bf16.gmra.mxu0 %v1006
        %v1026 = vpop.f32.mrf.mxu0
        %v1027 = vadd.f32 %v947, %v1026
        %v1028 = vpop.f32.mrf.mxu0
        %v1029 = vadd.f32 %v952, %v1028
        %1030 = vmatmul.bf16.gmra.mxu0 %v1009
        %v1031 = vpop.f32.mrf.mxu0
        %v1032 = vadd.f32 %v957, %v1031
        %v1033 = vpop.f32.mrf.mxu0
        %v1034 = vadd.f32 %v962, %v1033
        %1035 = vmatmul.bf16.gmra.mxu0 %v1012
        %v1036 = vpop.f32.mrf.mxu0
        %v1037 = vadd.f32 %v967, %v1036
        %v1038 = vpop.f32.mrf.mxu0
        %v1039 = vadd.f32 %v972, %v1038
        %1040 = vmatmul.bf16.gmra.mxu0 %v1015
        %v1041 = vpop.f32.mrf.mxu0
        %v1042 = vadd.f32 %v977, %v1041
        %v1043 = vpop.f32.mrf.mxu0
        %v1044 = vadd.f32 %v982, %v1043
        %1045 = vdwg.mxu0
        %1046 = vmatpush.bf16.msra.mxu0 0
        %1047 = vmatpush.bf16.msra.mxu0 0
        %1048 = vmatpush.bf16.msra.mxu0 0
        %1049 = vmatpush.bf16.msra.mxu0 0
        %1050 = vmatpush.bf16.msra.mxu0 0
        %1051 = vmatpush.bf16.msra.mxu0 0
        %1052 = vmatpush.bf16.msra.mxu0 %v921
        %1053 = vmatpush.bf16.msra.mxu0 %v913
        %1054 = vmatmul.bf16.gmra.mxu0 %v1006
        %v1055 = vpop.f32.mrf.mxu0
        %v1056 = vadd.f32 %v947, %v1055
        %v1057 = vpop.f32.mrf.mxu0
        %v1058 = vadd.f32 %v952, %v1057
        %1059 = vmatmul.bf16.gmra.mxu0 %v1009
        %v1060 = vpop.f32.mrf.mxu0
        %v1061 = vadd.f32 %v957, %v1060
        %v1062 = vpop.f32.mrf.mxu0
        %v1063 = vadd.f32 %v962, %v1062
        %1064 = vmatmul.bf16.gmra.mxu0 %v1012
        %v1065 = vpop.f32.mrf.mxu0
        %v1066 = vadd.f32 %v967, %v1065
        %v1067 = vpop.f32.mrf.mxu0
        %v1068 = vadd.f32 %v972, %v1067
        %1069 = vmatmul.bf16.gmra.mxu0 %v1015
        %v1070 = vpop.f32.mrf.mxu0
        %v1071 = vadd.f32 %v977, %v1070
        %v1072 = vpop.f32.mrf.mxu0
        %v1073 = vadd.f32 %v982, %v1072
        %1074 = vdwg.mxu0
        %1075 = vmatpush.bf16.msra.mxu0 0
        %1076 = vmatpush.bf16.msra.mxu0 0
        %1077 = vmatpush.bf16.msra.mxu0 0
        %1078 = vmatpush.bf16.msra.mxu0 0
        %1079 = vmatpush.bf16.msra.mxu0 0
        %1080 = vmatpush.bf16.msra.mxu0 0
        %1081 = vmatpush.bf16.msra.mxu0 %v922
        %1082 = vmatpush.bf16.msra.mxu0 %v914
        %1083 = vmatmul.bf16.gmra.mxu0 %v1006
        %v1084 = vpop.f32.mrf.mxu0
        %v1085 = vadd.f32 %v947, %v1084
        %v1086 = vpop.f32.mrf.mxu0
        %v1087 = vadd.f32 %v952, %v1086
        %1088 = vmatmul.bf16.gmra.mxu0 %v1009
        %v1089 = vpop.f32.mrf.mxu0
        %v1090 = vadd.f32 %v957, %v1089
        %v1091 = vpop.f32.mrf.mxu0
        %v1092 = vadd.f32 %v962, %v1091
        %1093 = vmatmul.bf16.gmra.mxu0 %v1012
        %v1094 = vpop.f32.mrf.mxu0
        %v1095 = vadd.f32 %v967, %v1094
        %v1096 = vpop.f32.mrf.mxu0
        %v1097 = vadd.f32 %v972, %v1096
        %1098 = vmatmul.bf16.gmra.mxu0 %v1015
        %v1099 = vpop.f32.mrf.mxu0
        %v1100 = vadd.f32 %v977, %v1099
        %v1101 = vpop.f32.mrf.mxu0
        %v1102 = vadd.f32 %v982, %v1101
        %1103 = vdwg.mxu0
        %1104 = vmatpush.bf16.msra.mxu0 0
        %1105 = vmatpush.bf16.msra.mxu0 0
        %1106 = vmatpush.bf16.msra.mxu0 0
        %1107 = vmatpush.bf16.msra.mxu0 0
        %1108 = vmatpush.bf16.msra.mxu0 0
        %1109 = vmatpush.bf16.msra.mxu0 0
        %1110 = vmatpush.bf16.msra.mxu0 %v923
        %1111 = vmatpush.bf16.msra.mxu0 %v915
        %1112 = vmatmul.bf16.gmra.mxu0 %v1006
        %v1113 = vpop.f32.mrf.mxu0
        %v1114 = vadd.f32 %v947, %v1113
        %v1115 = vpop.f32.mrf.mxu0
        %v1116 = vadd.f32 %v952, %v1115
        %1117 = vmatmul.bf16.gmra.mxu0 %v1009
        %v1118 = vpop.f32.mrf.mxu0
        %v1119 = vadd.f32 %v957, %v1118
        %v1120 = vpop.f32.mrf.mxu0
        %v1121 = vadd.f32 %v962, %v1120
        %1122 = vmatmul.bf16.gmra.mxu0 %v1012
        %v1123 = vpop.f32.mrf.mxu0
        %v1124 = vadd.f32 %v967, %v1123
        %v1125 = vpop.f32.mrf.mxu0
        %v1126 = vadd.f32 %v972, %v1125
        %1127 = vmatmul.bf16.gmra.mxu0 %v1015
        %v1128 = vpop.f32.mrf.mxu0
        %v1129 = vadd.f32 %v977, %v1128
        %v1130 = vpop.f32.mrf.mxu0
        %v1131 = vadd.f32 %v982, %v1130
        %1132 = vdwg.mxu0
        %1133 = vmatpush.bf16.msra.mxu0 0
        %1134 = vmatpush.bf16.msra.mxu0 0
        %1135 = vmatpush.bf16.msra.mxu0 0
        %1136 = vmatpush.bf16.msra.mxu0 0
        %1137 = vmatpush.bf16.msra.mxu0 0
        %1138 = vmatpush.bf16.msra.mxu0 0
        %1139 = vmatpush.bf16.msra.mxu0 %v924
        %1140 = vmatpush.bf16.msra.mxu0 %v916
        %1141 = vmatmul.bf16.gmra.mxu0 %v1006
        %v1142 = vpop.f32.mrf.mxu0
        %v1143 = vadd.f32 %v947, %v1142
        %v1144 = vpop.f32.mrf.mxu0
        %v1145 = vadd.f32 %v952, %v1144
        %1146 = vmatmul.bf16.gmra.mxu0 %v1009
        %v1147 = vpop.f32.mrf.mxu0
        %v1148 = vadd.f32 %v957, %v1147
        %v1149 = vpop.f32.mrf.mxu0
        %v1150 = vadd.f32 %v962, %v1149
        %1151 = vmatmul.bf16.gmra.mxu0 %v1012
        %v1152 = vpop.f32.mrf.mxu0
        %v1153 = vadd.f32 %v967, %v1152
        %v1154 = vpop.f32.mrf.mxu0
        %v1155 = vadd.f32 %v972, %v1154
        %1156 = vmatmul.bf16.gmra.mxu0 %v1015
        %v1157 = vpop.f32.mrf.mxu0
        %v1158 = vadd.f32 %v977, %v1157
        %v1159 = vpop.f32.mrf.mxu0
        %v1160 = vadd.f32 %v982, %v1159
        %1161 = vdwg.mxu0
        %1162 = vmatpush.bf16.msra.mxu0 0
        %1163 = vmatpush.bf16.msra.mxu0 0
        %1164 = vmatpush.bf16.msra.mxu0 0
        %1165 = vmatpush.bf16.msra.mxu0 0
        %1166 = vmatpush.bf16.msra.mxu0 0
        %1167 = vmatpush.bf16.msra.mxu0 0
        %1168 = vmatpush.bf16.msra.mxu0 %v925
        %1169 = vmatpush.bf16.msra.mxu0 %v917
        %1170 = vmatmul.bf16.gmra.mxu0 %v1006
        %v1171 = vpop.f32.mrf.mxu0
        %v1172 = vadd.f32 %v947, %v1171
        %v1173 = vpop.f32.mrf.mxu0
        %v1174 = vadd.f32 %v952, %v1173
        %1175 = vmatmul.bf16.gmra.mxu0 %v1009
        %v1176 = vpop.f32.mrf.mxu0
        %v1177 = vadd.f32 %v957, %v1176
        %v1178 = vpop.f32.mrf.mxu0
        %v1179 = vadd.f32 %v962, %v1178
        %1180 = vmatmul.bf16.gmra.mxu0 %v1012
        %v1181 = vpop.f32.mrf.mxu0
        %v1182 = vadd.f32 %v967, %v1181
        %v1183 = vpop.f32.mrf.mxu0
        %v1184 = vadd.f32 %v972, %v1183
        %1185 = vmatmul.bf16.gmra.mxu0 %v1015
        %v1186 = vpop.f32.mrf.mxu0
        %v1187 = vadd.f32 %v977, %v1186
        %v1188 = vpop.f32.mrf.mxu0
        %v1189 = vadd.f32 %v982, %v1188
        %1190 = vdwg.mxu0
        %1191 = vmatpush.bf16.msra.mxu0 0
        %1192 = vmatpush.bf16.msra.mxu0 0
        %1193 = vmatpush.bf16.msra.mxu0 0
        %1194 = vmatpush.bf16.msra.mxu0 0
        %1195 = vmatpush.bf16.msra.mxu0 0
        %1196 = vmatpush.bf16.msra.mxu0 0
        %1197 = vmatpush.bf16.msra.mxu0 %v926
        %1198 = vmatpush.bf16.msra.mxu0 %v918
        %1199 = vmatmul.bf16.gmra.mxu0 %v1006
        %v1200 = vpop.f32.mrf.mxu0
        %v1201 = vadd.f32 %v947, %v1200
        %v1202 = vpop.f32.mrf.mxu0
        %v1203 = vadd.f32 %v952, %v1202
        %1204 = vmatmul.bf16.gmra.mxu0 %v1009
        %v1205 = vpop.f32.mrf.mxu0
        %v1206 = vadd.f32 %v957, %v1205
        %v1207 = vpop.f32.mrf.mxu0
        %v1208 = vadd.f32 %v962, %v1207
        %1209 = vmatmul.bf16.gmra.mxu0 %v1012
        %v1210 = vpop.f32.mrf.mxu0
        %v1211 = vadd.f32 %v967, %v1210
        %v1212 = vpop.f32.mrf.mxu0
        %v1213 = vadd.f32 %v972, %v1212
        %1214 = vmatmul.bf16.gmra.mxu0 %v1015
        %v1215 = vpop.f32.mrf.mxu0
        %v1216 = vadd.f32 %v977, %v1215
        %v1217 = vpop.f32.mrf.mxu0
        %v1218 = vadd.f32 %v982, %v1217
        %1219 = vdwg.mxu0
        %1220 = vmatpush.bf16.msra.mxu0 0
        %1221 = vmatpush.bf16.msra.mxu0 0
        %1222 = vmatpush.bf16.msra.mxu0 0
        %1223 = vmatpush.bf16.msra.mxu0 0
        %1224 = vmatpush.bf16.msra.mxu0 0
        %1225 = vmatpush.bf16.msra.mxu0 0
        %1226 = vmatpush.bf16.msra.mxu0 %v927
        %1227 = vmatpush.bf16.msra.mxu0 %v919
        %1228 = vmatmul.bf16.gmra.mxu0 %v1006
        %v1229 = vpop.f32.mrf.mxu0
        %v1230 = vadd.f32 %v947, %v1229
        %v1231 = vpop.f32.mrf.mxu0
        %v1232 = vadd.f32 %v952, %v1231
        %1233 = vmatmul.bf16.gmra.mxu0 %v1009
        %v1234 = vpop.f32.mrf.mxu0
        %v1235 = vadd.f32 %v957, %v1234
        %v1236 = vpop.f32.mrf.mxu0
        %v1237 = vadd.f32 %v962, %v1236
        %1238 = vmatmul.bf16.gmra.mxu0 %v1012
        %v1239 = vpop.f32.mrf.mxu0
        %v1240 = vadd.f32 %v967, %v1239
        %v1241 = vpop.f32.mrf.mxu0
        %v1242 = vadd.f32 %v972, %v1241
        %1243 = vmatmul.bf16.gmra.mxu0 %v1015
        %v1244 = vpop.f32.mrf.mxu0
        %v1245 = vadd.f32 %v977, %v1244
        %v1246 = vpop.f32.mrf.mxu0
        %v1247 = vadd.f32 %v982, %v1246
        %1248 = vdwg.mxu0
        %v1249 = vtanh.pop %v1027
        %v1250 = vtanh.pop %v1056
        %v1251 = vtanh.pop %v1085
        %v1252 = vtanh.pop %v1114
        %v1253 = vtanh.pop %v1143
        %v1254 = vtanh.pop %v1172
        %v1255 = vtanh.pop %v1201
        %v1256 = vtanh.pop %v1230
        %v1257 = vtanh.pop %v1029
        %v1258 = vtanh.pop %v1058
        %v1259 = vtanh.pop %v1087
        %v1260 = vtanh.pop %v1116
        %v1261 = vtanh.pop %v1145
        %v1262 = vtanh.pop %v1174
        %v1263 = vtanh.pop %v1203
        %v1264 = vtanh.pop %v1232
        %v1265 = vtanh.pop %v1032
        %v1266 = vtanh.pop %v1061
        %v1267 = vtanh.pop %v1090
        %v1268 = vtanh.pop %v1119
        %v1269 = vtanh.pop %v1148
        %v1270 = vtanh.pop %v1177
        %v1271 = vtanh.pop %v1206
        %v1272 = vtanh.pop %v1235
        %v1273 = vtanh.pop %v1034
        %v1274 = vtanh.pop %v1063
        %v1275 = vtanh.pop %v1092
        %v1276 = vtanh.pop %v1121
        %v1277 = vtanh.pop %v1150
        %v1278 = vtanh.pop %v1179
        %v1279 = vtanh.pop %v1208
        %v1280 = vtanh.pop %v1237
        %v1281 = vtanh.pop %v1037
        %v1282 = vtanh.pop %v1066
        %v1283 = vtanh.pop %v1095
        %v1284 = vtanh.pop %v1124
        %v1285 = vtanh.pop %v1153
        %v1286 = vtanh.pop %v1182
        %v1287 = vtanh.pop %v1211
        %v1288 = vtanh.pop %v1240
        %v1289 = vtanh.pop %v1039
        %v1290 = vtanh.pop %v1068
        %v1291 = vtanh.pop %v1097
        %v1292 = vtanh.pop %v1126
        %v1293 = vtanh.pop %v1155
        %v1294 = vtanh.pop %v1184
        %v1295 = vtanh.pop %v1213
        %v1296 = vtanh.pop %v1242
        %v1297 = vtanh.pop %v1042
        %v1298 = vtanh.pop %v1071
        %v1299 = vtanh.pop %v1100
        %v1300 = vtanh.pop %v1129
        %v1301 = vtanh.pop %v1158
        %v1302 = vtanh.pop %v1187
        %v1303 = vtanh.pop %v1216
        %v1304 = vtanh.pop %v1245
        %v1305 = vtanh.pop %v1044
        %v1306 = vtanh.pop %v1073
        %v1307 = vtanh.pop %v1102
        %v1308 = vtanh.pop %v1131
        %v1309 = vtanh.pop %v1160
        %v1310 = vtanh.pop %v1189
        %v1311 = vtanh.pop %v1218
        %v1312 = vtanh.pop %v1247
        %v1313 = vpack.c.bf16 %v1257, %v1249
        %v1314 = vpack.c.bf16 %v1258, %v1250
        %v1315 = vpack.c.bf16 %v1259, %v1251
        %v1316 = vpack.c.bf16 %v1260, %v1252
        %v1317 = vpack.c.bf16 %v1261, %v1253
        %v1318 = vpack.c.bf16 %v1262, %v1254
        %v1319 = vpack.c.bf16 %v1263, %v1255
        %v1320 = vpack.c.bf16 %v1264, %v1256
        %v1321 = vpack.c.bf16 %v1273, %v1265
        %v1322 = vpack.c.bf16 %v1274, %v1266
        %v1323 = vpack.c.bf16 %v1275, %v1267
        %v1324 = vpack.c.bf16 %v1276, %v1268
        %v1325 = vpack.c.bf16 %v1277, %v1269
        %v1326 = vpack.c.bf16 %v1278, %v1270
        %v1327 = vpack.c.bf16 %v1279, %v1271
        %v1328 = vpack.c.bf16 %v1280, %v1272
        %v1329 = vpack.c.bf16 %v1289, %v1281
        %v1330 = vpack.c.bf16 %v1290, %v1282
        %v1331 = vpack.c.bf16 %v1291, %v1283
        %v1332 = vpack.c.bf16 %v1292, %v1284
        %v1333 = vpack.c.bf16 %v1293, %v1285
        %v1334 = vpack.c.bf16 %v1294, %v1286
        %v1335 = vpack.c.bf16 %v1295, %v1287
        %v1336 = vpack.c.bf16 %v1296, %v1288
        %v1337 = vpack.c.bf16 %v1305, %v1297
        %v1338 = vpack.c.bf16 %v1306, %v1298
        %v1339 = vpack.c.bf16 %v1307, %v1299
        %v1340 = vpack.c.bf16 %v1308, %v1300
        %v1341 = vpack.c.bf16 %v1309, %v1301
        %v1342 = vpack.c.bf16 %v1310, %v1302
        %v1343 = vpack.c.bf16 %v1311, %v1303
        %v1344 = vpack.c.bf16 %v1312, %v1304
        %v1345 = vld [vmem:[%s7] sm:$0xf]
        %v1346 = vld [vmem:[%s7 + $0x4] sm:$0xf]
        %v1347 = vld [vmem:[%s7 + $0x8] sm:$0xf]
        %v1348 = vld [vmem:[%s7 + $0xc] sm:$0xf]
        %v1349 = vld [vmem:[%s8] sm:$0xff]
        %v1350 = vld [vmem:[%s8 + $0x8] sm:$0xff]
        %v1351 = vld [vmem:[%s8 + $0x10] sm:$0xff]
        %v1352 = vld [vmem:[%s8 + $0x18] sm:$0xff]
        %1354 = vset.pattern.permute.xlu0 0
        %1355 = vperm.xlu0 %1354, %v1349
        %v1356 = vpop.permute.xlu0 %1355
        %1359 = vset.pattern.permute.xlu0 0
        %1360 = vperm.xlu0 %1359, %v1350
        %v1361 = vpop.permute.xlu0 %1360
        %1364 = vset.pattern.permute.xlu0 0
        %1365 = vperm.xlu0 %1364, %v1351
        %v1366 = vpop.permute.xlu0 %1365
        %1369 = vset.pattern.permute.xlu0 0
        %1370 = vperm.xlu0 %1369, %v1352
        %v1371 = vpop.permute.xlu0 %1370
        %v1377 = vunpack.c.l.b16 %v1345
        %v1378 = vunpack.c.l.b16 %v1346
        %v1379 = vunpack.c.l.b16 %v1347
        %v1380 = vunpack.c.l.b16 %v1348
        %v1381 = vpack.c.b16 %v1378, %v1377
        %v1382 = vpack.c.b16 %v1380, %v1379
        %vm1383 = vcmask 523264
        %v1385 = vsel %vm1383, %v1381, 0
        %v1388 = vsel %vm1383, %v1382, 0
        %1390 = vmatpush.bf16.msra.mxu0 0
        %1391 = vmatpush.bf16.msra.mxu0 0
        %1392 = vmatpush.bf16.msra.mxu0 0
        %1393 = vmatpush.bf16.msra.mxu0 0
        %1394 = vmatpush.bf16.msra.mxu0 %v1337
        %1395 = vmatpush.bf16.msra.mxu0 %v1329
        %1396 = vmatpush.bf16.msra.mxu0 %v1321
        %1397 = vmatpush.bf16.msra.mxu0 %v1313
        %1398 = vmatmul.bf16.gmra.mxu0 %v1385
        %v1399 = vpop.f32.mrf.mxu0
        %v1400 = vadd.f32 %v1356, %v1399
        %v1401 = vpop.f32.mrf.mxu0
        %v1402 = vadd.f32 %v1361, %v1401
        %1403 = vmatmul.bf16.gmra.mxu0 %v1388
        %v1404 = vpop.f32.mrf.mxu0
        %v1405 = vadd.f32 %v1366, %v1404
        %v1406 = vpop.f32.mrf.mxu0
        %v1407 = vadd.f32 %v1371, %v1406
        %1408 = vdwg.mxu0
        %1409 = vmatpush.bf16.msra.mxu0 0
        %1410 = vmatpush.bf16.msra.mxu0 0
        %1411 = vmatpush.bf16.msra.mxu0 0
        %1412 = vmatpush.bf16.msra.mxu0 0
        %1413 = vmatpush.bf16.msra.mxu0 %v1338
        %1414 = vmatpush.bf16.msra.mxu0 %v1330
        %1415 = vmatpush.bf16.msra.mxu0 %v1322
        %1416 = vmatpush.bf16.msra.mxu0 %v1314
        %1417 = vmatmul.bf16.gmra.mxu0 %v1385
        %v1418 = vpop.f32.mrf.mxu0
        %v1419 = vadd.f32 %v1356, %v1418
        %v1420 = vpop.f32.mrf.mxu0
        %v1421 = vadd.f32 %v1361, %v1420
        %1422 = vmatmul.bf16.gmra.mxu0 %v1388
        %v1423 = vpop.f32.mrf.mxu0
        %v1424 = vadd.f32 %v1366, %v1423
        %v1425 = vpop.f32.mrf.mxu0
        %v1426 = vadd.f32 %v1371, %v1425
        %1427 = vdwg.mxu0
        %1428 = vmatpush.bf16.msra.mxu0 0
        %1429 = vmatpush.bf16.msra.mxu0 0
        %1430 = vmatpush.bf16.msra.mxu0 0
        %1431 = vmatpush.bf16.msra.mxu0 0
        %1432 = vmatpush.bf16.msra.mxu0 %v1339
        %1433 = vmatpush.bf16.msra.mxu0 %v1331
        %1434 = vmatpush.bf16.msra.mxu0 %v1323
        %1435 = vmatpush.bf16.msra.mxu0 %v1315
        %1436 = vmatmul.bf16.gmra.mxu0 %v1385
        %v1437 = vpop.f32.mrf.mxu0
        %v1438 = vadd.f32 %v1356, %v1437
        %v1439 = vpop.f32.mrf.mxu0
        %v1440 = vadd.f32 %v1361, %v1439
        %1441 = vmatmul.bf16.gmra.mxu0 %v1388
        %v1442 = vpop.f32.mrf.mxu0
        %v1443 = vadd.f32 %v1366, %v1442
        %v1444 = vpop.f32.mrf.mxu0
        %v1445 = vadd.f32 %v1371, %v1444
        %1446 = vdwg.mxu0
        %1447 = vmatpush.bf16.msra.mxu0 0
        %1448 = vmatpush.bf16.msra.mxu0 0
        %1449 = vmatpush.bf16.msra.mxu0 0
        %1450 = vmatpush.bf16.msra.mxu0 0
        %1451 = vmatpush.bf16.msra.mxu0 %v1340
        %1452 = vmatpush.bf16.msra.mxu0 %v1332
        %1453 = vmatpush.bf16.msra.mxu0 %v1324
        %1454 = vmatpush.bf16.msra.mxu0 %v1316
        %1455 = vmatmul.bf16.gmra.mxu0 %v1385
        %v1456 = vpop.f32.mrf.mxu0
        %v1457 = vadd.f32 %v1356, %v1456
        %v1458 = vpop.f32.mrf.mxu0
        %v1459 = vadd.f32 %v1361, %v1458
        %1460 = vmatmul.bf16.gmra.mxu0 %v1388
        %v1461 = vpop.f32.mrf.mxu0
        %v1462 = vadd.f32 %v1366, %v1461
        %v1463 = vpop.f32.mrf.mxu0
        %v1464 = vadd.f32 %v1371, %v1463
        %1465 = vdwg.mxu0
        %1466 = vmatpush.bf16.msra.mxu0 0
        %1467 = vmatpush.bf16.msra.mxu0 0
        %1468 = vmatpush.bf16.msra.mxu0 0
        %1469 = vmatpush.bf16.msra.mxu0 0
        %1470 = vmatpush.bf16.msra.mxu0 %v1341
        %1471 = vmatpush.bf16.msra.mxu0 %v1333
        %1472 = vmatpush.bf16.msra.mxu0 %v1325
        %1473 = vmatpush.bf16.msra.mxu0 %v1317
        %1474 = vmatmul.bf16.gmra.mxu0 %v1385
        %v1475 = vpop.f32.mrf.mxu0
        %v1476 = vadd.f32 %v1356, %v1475
        %v1477 = vpop.f32.mrf.mxu0
        %v1478 = vadd.f32 %v1361, %v1477
        %1479 = vmatmul.bf16.gmra.mxu0 %v1388
        %v1480 = vpop.f32.mrf.mxu0
        %v1481 = vadd.f32 %v1366, %v1480
        %v1482 = vpop.f32.mrf.mxu0
        %v1483 = vadd.f32 %v1371, %v1482
        %1484 = vdwg.mxu0
        %1485 = vmatpush.bf16.msra.mxu0 0
        %1486 = vmatpush.bf16.msra.mxu0 0
        %1487 = vmatpush.bf16.msra.mxu0 0
        %1488 = vmatpush.bf16.msra.mxu0 0
        %1489 = vmatpush.bf16.msra.mxu0 %v1342
        %1490 = vmatpush.bf16.msra.mxu0 %v1334
        %1491 = vmatpush.bf16.msra.mxu0 %v1326
        %1492 = vmatpush.bf16.msra.mxu0 %v1318
        %1493 = vmatmul.bf16.gmra.mxu0 %v1385
        %v1494 = vpop.f32.mrf.mxu0
        %v1495 = vadd.f32 %v1356, %v1494
        %v1496 = vpop.f32.mrf.mxu0
        %v1497 = vadd.f32 %v1361, %v1496
        %1498 = vmatmul.bf16.gmra.mxu0 %v1388
        %v1499 = vpop.f32.mrf.mxu0
        %v1500 = vadd.f32 %v1366, %v1499
        %v1501 = vpop.f32.mrf.mxu0
        %v1502 = vadd.f32 %v1371, %v1501
        %1503 = vdwg.mxu0
        %1504 = vmatpush.bf16.msra.mxu0 0
        %1505 = vmatpush.bf16.msra.mxu0 0
        %1506 = vmatpush.bf16.msra.mxu0 0
        %1507 = vmatpush.bf16.msra.mxu0 0
        %1508 = vmatpush.bf16.msra.mxu0 %v1343
        %1509 = vmatpush.bf16.msra.mxu0 %v1335
        %1510 = vmatpush.bf16.msra.mxu0 %v1327
        %1511 = vmatpush.bf16.msra.mxu0 %v1319
        %1512 = vmatmul.bf16.gmra.mxu0 %v1385
        %v1513 = vpop.f32.mrf.mxu0
        %v1514 = vadd.f32 %v1356, %v1513
        %v1515 = vpop.f32.mrf.mxu0
        %v1516 = vadd.f32 %v1361, %v1515
        %1517 = vmatmul.bf16.gmra.mxu0 %v1388
        %v1518 = vpop.f32.mrf.mxu0
        %v1519 = vadd.f32 %v1366, %v1518
        %v1520 = vpop.f32.mrf.mxu0
        %v1521 = vadd.f32 %v1371, %v1520
        %1522 = vdwg.mxu0
        %1523 = vmatpush.bf16.msra.mxu0 0
        %1524 = vmatpush.bf16.msra.mxu0 0
        %1525 = vmatpush.bf16.msra.mxu0 0
        %1526 = vmatpush.bf16.msra.mxu0 0
        %1527 = vmatpush.bf16.msra.mxu0 %v1344
        %1528 = vmatpush.bf16.msra.mxu0 %v1336
        %1529 = vmatpush.bf16.msra.mxu0 %v1328
        %1530 = vmatpush.bf16.msra.mxu0 %v1320
        %1531 = vmatmul.bf16.gmra.mxu0 %v1385
        %v1532 = vpop.f32.mrf.mxu0
        %v1533 = vadd.f32 %v1356, %v1532
        %v1534 = vpop.f32.mrf.mxu0
        %v1535 = vadd.f32 %v1361, %v1534
        %1536 = vmatmul.bf16.gmra.mxu0 %v1388
        %v1537 = vpop.f32.mrf.mxu0
        %v1538 = vadd.f32 %v1366, %v1537
        %v1539 = vpop.f32.mrf.mxu0
        %v1540 = vadd.f32 %v1371, %v1539
        %1541 = vdwg.mxu0
        %v1542 = vtanh.pop %v1400
        %v1543 = vtanh.pop %v1419
        %v1544 = vtanh.pop %v1438
        %v1545 = vtanh.pop %v1457
        %v1546 = vtanh.pop %v1476
        %v1547 = vtanh.pop %v1495
        %v1548 = vtanh.pop %v1514
        %v1549 = vtanh.pop %v1533
        %v1550 = vtanh.pop %v1402
        %v1551 = vtanh.pop %v1421
        %v1552 = vtanh.pop %v1440
        %v1553 = vtanh.pop %v1459
        %v1554 = vtanh.pop %v1478
        %v1555 = vtanh.pop %v1497
        %v1556 = vtanh.pop %v1516
        %v1557 = vtanh.pop %v1535
        %v1558 = vtanh.pop %v1405
        %v1559 = vtanh.pop %v1424
        %v1560 = vtanh.pop %v1443
        %v1561 = vtanh.pop %v1462
        %v1562 = vtanh.pop %v1481
        %v1563 = vtanh.pop %v1500
        %v1564 = vtanh.pop %v1519
        %v1565 = vtanh.pop %v1538
        %v1566 = vtanh.pop %v1407
        %v1567 = vtanh.pop %v1426
        %v1568 = vtanh.pop %v1445
        %v1569 = vtanh.pop %v1464
        %v1570 = vtanh.pop %v1483
        %v1571 = vtanh.pop %v1502
        %v1572 = vtanh.pop %v1521
        %v1573 = vtanh.pop %v1540
        %v1574 = vpack.c.bf16 %v1550, %v1542
        %v1575 = vpack.c.bf16 %v1551, %v1543
        %v1576 = vpack.c.bf16 %v1552, %v1544
        %v1577 = vpack.c.bf16 %v1553, %v1545
        %v1578 = vpack.c.bf16 %v1554, %v1546
        %v1579 = vpack.c.bf16 %v1555, %v1547
        %v1580 = vpack.c.bf16 %v1556, %v1548
        %v1581 = vpack.c.bf16 %v1557, %v1549
        %v1582 = vpack.c.bf16 %v1566, %v1558
        %v1583 = vpack.c.bf16 %v1567, %v1559
        %v1584 = vpack.c.bf16 %v1568, %v1560
        %v1585 = vpack.c.bf16 %v1569, %v1561
        %v1586 = vpack.c.bf16 %v1570, %v1562
        %v1587 = vpack.c.bf16 %v1571, %v1563
        %v1588 = vpack.c.bf16 %v1572, %v1564
        %v1589 = vpack.c.bf16 %v1573, %v1565
        %v1590 = vld [vmem:[%s9] sm:$0xf]
        %v1591 = vld [vmem:[%s9 + $0x4] sm:$0xf]
        %v1592 = vld [vmem:[%s10] sm:$0xff]
        %v1593 = vld [vmem:[%s10 + $0x8] sm:$0xff]
        %1595 = vset.pattern.permute.xlu0 0
        %1596 = vperm.xlu0 %1595, %v1592
        %v1597 = vpop.permute.xlu0 %1596
        %1600 = vset.pattern.permute.xlu0 0
        %1601 = vperm.xlu0 %1600, %v1593
        %v1602 = vpop.permute.xlu0 %1601
        %v1606 = vunpack.c.l.b16 %v1590
        %v1607 = vunpack.c.l.b16 %v1591
        %v1608 = vpack.c.b16 %v1607, %v1606
        %v1610 = vsel %vm1004, %v1608, 0
        %1612 = vmatpush.bf16.msra.mxu0 0
        %1613 = vmatpush.bf16.msra.mxu0 0
        %1614 = vmatpush.bf16.msra.mxu0 0
        %1615 = vmatpush.bf16.msra.mxu0 0
        %1616 = vmatpush.bf16.msra.mxu0 0
        %1617 = vmatpush.bf16.msra.mxu0 0
        %1618 = vmatpush.bf16.msra.mxu0 %v1582
        %1619 = vmatpush.bf16.msra.mxu0 %v1574
        %1620 = vmatmul.bf16.gmra.mxu0 %v1610
        %v1621 = vpop.f32.mrf.mxu0
        %v1622 = vadd.f32 %v1597, %v1621
        %v1623 = vpop.f32.mrf.mxu0
        %v1624 = vadd.f32 %v1602, %v1623
        %1625 = vdwg.mxu0
        %1626 = vmatpush.bf16.msra.mxu0 0
        %1627 = vmatpush.bf16.msra.mxu0 0
        %1628 = vmatpush.bf16.msra.mxu0 0
        %1629 = vmatpush.bf16.msra.mxu0 0
        %1630 = vmatpush.bf16.msra.mxu0 0
        %1631 = vmatpush.bf16.msra.mxu0 0
        %1632 = vmatpush.bf16.msra.mxu0 %v1583
        %1633 = vmatpush.bf16.msra.mxu0 %v1575
        %1634 = vmatmul.bf16.gmra.mxu0 %v1610
        %v1635 = vpop.f32.mrf.mxu0
        %v1636 = vadd.f32 %v1597, %v1635
        %v1637 = vpop.f32.mrf.mxu0
        %v1638 = vadd.f32 %v1602, %v1637
        %1639 = vdwg.mxu0
        %1640 = vmatpush.bf16.msra.mxu0 0
        %1641 = vmatpush.bf16.msra.mxu0 0
        %1642 = vmatpush.bf16.msra.mxu0 0
        %1643 = vmatpush.bf16.msra.mxu0 0
        %1644 = vmatpush.bf16.msra.mxu0 0
        %1645 = vmatpush.bf16.msra.mxu0 0
        %1646 = vmatpush.bf16.msra.mxu0 %v1584
        %1647 = vmatpush.bf16.msra.mxu0 %v1576
        %1648 = vmatmul.bf16.gmra.mxu0 %v1610
        %v1649 = vpop.f32.mrf.mxu0
        %v1650 = vadd.f32 %v1597, %v1649
        %v1651 = vpop.f32.mrf.mxu0
        %v1652 = vadd.f32 %v1602, %v1651
        %1653 = vdwg.mxu0
        %1654 = vmatpush.bf16.msra.mxu0 0
        %1655 = vmatpush.bf16.msra.mxu0 0
        %1656 = vmatpush.bf16.msra.mxu0 0
        %1657 = vmatpush.bf16.msra.mxu0 0
        %1658 = vmatpush.bf16.msra.mxu0 0
        %1659 = vmatpush.bf16.msra.mxu0 0
        %1660 = vmatpush.bf16.msra.mxu0 %v1585
        %1661 = vmatpush.bf16.msra.mxu0 %v1577
        %1662 = vmatmul.bf16.gmra.mxu0 %v1610
        %v1663 = vpop.f32.mrf.mxu0
        %v1664 = vadd.f32 %v1597, %v1663
        %v1665 = vpop.f32.mrf.mxu0
        %v1666 = vadd.f32 %v1602, %v1665
        %1667 = vdwg.mxu0
        %1668 = vmatpush.bf16.msra.mxu0 0
        %1669 = vmatpush.bf16.msra.mxu0 0
        %1670 = vmatpush.bf16.msra.mxu0 0
        %1671 = vmatpush.bf16.msra.mxu0 0
        %1672 = vmatpush.bf16.msra.mxu0 0
        %1673 = vmatpush.bf16.msra.mxu0 0
        %1674 = vmatpush.bf16.msra.mxu0 %v1586
        %1675 = vmatpush.bf16.msra.mxu0 %v1578
        %1676 = vmatmul.bf16.gmra.mxu0 %v1610
        %v1677 = vpop.f32.mrf.mxu0
        %v1678 = vadd.f32 %v1597, %v1677
        %v1679 = vpop.f32.mrf.mxu0
        %v1680 = vadd.f32 %v1602, %v1679
        %1681 = vdwg.mxu0
        %1682 = vmatpush.bf16.msra.mxu0 0
        %1683 = vmatpush.bf16.msra.mxu0 0
        %1684 = vmatpush.bf16.msra.mxu0 0
        %1685 = vmatpush.bf16.msra.mxu0 0
        %1686 = vmatpush.bf16.msra.mxu0 0
        %1687 = vmatpush.bf16.msra.mxu0 0
        %1688 = vmatpush.bf16.msra.mxu0 %v1587
        %1689 = vmatpush.bf16.msra.mxu0 %v1579
        %1690 = vmatmul.bf16.gmra.mxu0 %v1610
        %v1691 = vpop.f32.mrf.mxu0
        %v1692 = vadd.f32 %v1597, %v1691
        %v1693 = vpop.f32.mrf.mxu0
        %v1694 = vadd.f32 %v1602, %v1693
        %1695 = vdwg.mxu0
        %1696 = vmatpush.bf16.msra.mxu0 0
        %1697 = vmatpush.bf16.msra.mxu0 0
        %1698 = vmatpush.bf16.msra.mxu0 0
        %1699 = vmatpush.bf16.msra.mxu0 0
        %1700 = vmatpush.bf16.msra.mxu0 0
        %1701 = vmatpush.bf16.msra.mxu0 0
        %1702 = vmatpush.bf16.msra.mxu0 %v1588
        %1703 = vmatpush.bf16.msra.mxu0 %v1580
        %1704 = vmatmul.bf16.gmra.mxu0 %v1610
        %v1705 = vpop.f32.mrf.mxu0
        %v1706 = vadd.f32 %v1597, %v1705
        %v1707 = vpop.f32.mrf.mxu0
        %v1708 = vadd.f32 %v1602, %v1707
        %1709 = vdwg.mxu0
        %1710 = vmatpush.bf16.msra.mxu0 0
        %1711 = vmatpush.bf16.msra.mxu0 0
        %1712 = vmatpush.bf16.msra.mxu0 0
        %1713 = vmatpush.bf16.msra.mxu0 0
        %1714 = vmatpush.bf16.msra.mxu0 0
        %1715 = vmatpush.bf16.msra.mxu0 0
        %1716 = vmatpush.bf16.msra.mxu0 %v1589
        %1717 = vmatpush.bf16.msra.mxu0 %v1581
        %1718 = vmatmul.bf16.gmra.mxu0 %v1610
        %v1719 = vpop.f32.mrf.mxu0
        %v1720 = vadd.f32 %v1597, %v1719
        %v1721 = vpop.f32.mrf.mxu0
        %v1722 = vadd.f32 %v1602, %v1721
        %1723 = vdwg.mxu0
        %v1724 = vtanh.pop %v1622
        %v1725 = vtanh.pop %v1636
        %v1726 = vtanh.pop %v1650
        %v1727 = vtanh.pop %v1664
        %v1728 = vtanh.pop %v1678
        %v1729 = vtanh.pop %v1692
        %v1730 = vtanh.pop %v1706
        %v1731 = vtanh.pop %v1720
        %v1732 = vtanh.pop %v1624
        %v1733 = vtanh.pop %v1638
        %v1734 = vtanh.pop %v1652
        %v1735 = vtanh.pop %v1666
        %v1736 = vtanh.pop %v1680
        %v1737 = vtanh.pop %v1694
        %v1738 = vtanh.pop %v1708
        %v1739 = vtanh.pop %v1722
        %v1740 = vpack.c.bf16 %v1732, %v1724
        %v1741 = vpack.c.bf16 %v1733, %v1725
        %v1742 = vpack.c.bf16 %v1734, %v1726
        %v1743 = vpack.c.bf16 %v1735, %v1727
        %v1744 = vpack.c.bf16 %v1736, %v1728
        %v1745 = vpack.c.bf16 %v1737, %v1729
        %v1746 = vpack.c.bf16 %v1738, %v1730
        %v1747 = vpack.c.bf16 %v1739, %v1731
        %v1748 = vld [vmem:[%s11] sm:$0xf]
        %v1749 = vld [vmem:[%s12] sm:$0xff]
        %1751 = vset.pattern.permute.xlu0 0
        %1752 = vperm.xlu0 %1751, %v1749
        %v1753 = vpop.permute.xlu0 %1752
        %v1756 = vsel %vm721, %v1748, 0
        %1758 = vmatpush.bf16.msra.mxu0 0
        %1759 = vmatpush.bf16.msra.mxu0 0
        %1760 = vmatpush.bf16.msra.mxu0 0
        %1761 = vmatpush.bf16.msra.mxu0 0
        %1762 = vmatpush.bf16.msra.mxu0 0
        %1763 = vmatpush.bf16.msra.mxu0 0
        %1764 = vmatpush.bf16.msra.mxu0 0
        %1765 = vmatpush.bf16.msra.mxu0 %v1740
        %1766 = vmatmul.bf16.gmra.mxu0 %v1756
        %v1767 = vpop.f32.mrf.mxu0
        %v1768 = vadd.f32 %v1753, %v1767
        %v1769 = vpop.f32.mrf.mxu0
        %1770 = vdwg.mxu0
        %1771 = vmatpush.bf16.msra.mxu0 0
        %1772 = vmatpush.bf16.msra.mxu0 0
        %1773 = vmatpush.bf16.msra.mxu0 0
        %1774 = vmatpush.bf16.msra.mxu0 0
        %1775 = vmatpush.bf16.msra.mxu0 0
        %1776 = vmatpush.bf16.msra.mxu0 0
        %1777 = vmatpush.bf16.msra.mxu0 0
        %1778 = vmatpush.bf16.msra.mxu0 %v1741
        %1779 = vmatmul.bf16.gmra.mxu0 %v1756
        %v1780 = vpop.f32.mrf.mxu0
        %v1781 = vadd.f32 %v1753, %v1780
        %v1782 = vpop.f32.mrf.mxu0
        %1783 = vdwg.mxu0
        %1784 = vmatpush.bf16.msra.mxu0 0
        %1785 = vmatpush.bf16.msra.mxu0 0
        %1786 = vmatpush.bf16.msra.mxu0 0
        %1787 = vmatpush.bf16.msra.mxu0 0
        %1788 = vmatpush.bf16.msra.mxu0 0
        %1789 = vmatpush.bf16.msra.mxu0 0
        %1790 = vmatpush.bf16.msra.mxu0 0
        %1791 = vmatpush.bf16.msra.mxu0 %v1742
        %1792 = vmatmul.bf16.gmra.mxu0 %v1756
        %v1793 = vpop.f32.mrf.mxu0
        %v1794 = vadd.f32 %v1753, %v1793
        %v1795 = vpop.f32.mrf.mxu0
        %1796 = vdwg.mxu0
        %1797 = vmatpush.bf16.msra.mxu0 0
        %1798 = vmatpush.bf16.msra.mxu0 0
        %1799 = vmatpush.bf16.msra.mxu0 0
        %1800 = vmatpush.bf16.msra.mxu0 0
        %1801 = vmatpush.bf16.msra.mxu0 0
        %1802 = vmatpush.bf16.msra.mxu0 0
        %1803 = vmatpush.bf16.msra.mxu0 0
        %1804 = vmatpush.bf16.msra.mxu0 %v1743
        %1805 = vmatmul.bf16.gmra.mxu0 %v1756
        %v1806 = vpop.f32.mrf.mxu0
        %v1807 = vadd.f32 %v1753, %v1806
        %v1808 = vpop.f32.mrf.mxu0
        %1809 = vdwg.mxu0
        %1810 = vmatpush.bf16.msra.mxu0 0
        %1811 = vmatpush.bf16.msra.mxu0 0
        %1812 = vmatpush.bf16.msra.mxu0 0
        %1813 = vmatpush.bf16.msra.mxu0 0
        %1814 = vmatpush.bf16.msra.mxu0 0
        %1815 = vmatpush.bf16.msra.mxu0 0
        %1816 = vmatpush.bf16.msra.mxu0 0
        %1817 = vmatpush.bf16.msra.mxu0 %v1744
        %1818 = vmatmul.bf16.gmra.mxu0 %v1756
        %v1819 = vpop.f32.mrf.mxu0
        %v1820 = vadd.f32 %v1753, %v1819
        %v1821 = vpop.f32.mrf.mxu0
        %1822 = vdwg.mxu0
        %1823 = vmatpush.bf16.msra.mxu0 0
        %1824 = vmatpush.bf16.msra.mxu0 0
        %1825 = vmatpush.bf16.msra.mxu0 0
        %1826 = vmatpush.bf16.msra.mxu0 0
        %1827 = vmatpush.bf16.msra.mxu0 0
        %1828 = vmatpush.bf16.msra.mxu0 0
        %1829 = vmatpush.bf16.msra.mxu0 0
        %1830 = vmatpush.bf16.msra.mxu0 %v1745
        %1831 = vmatmul.bf16.gmra.mxu0 %v1756
        %v1832 = vpop.f32.mrf.mxu0
        %v1833 = vadd.f32 %v1753, %v1832
        %v1834 = vpop.f32.mrf.mxu0
        %1835 = vdwg.mxu0
        %1836 = vmatpush.bf16.msra.mxu0 0
        %1837 = vmatpush.bf16.msra.mxu0 0
        %1838 = vmatpush.bf16.msra.mxu0 0
        %1839 = vmatpush.bf16.msra.mxu0 0
        %1840 = vmatpush.bf16.msra.mxu0 0
        %1841 = vmatpush.bf16.msra.mxu0 0
        %1842 = vmatpush.bf16.msra.mxu0 0
        %1843 = vmatpush.bf16.msra.mxu0 %v1746
        %1844 = vmatmul.bf16.gmra.mxu0 %v1756
        %v1845 = vpop.f32.mrf.mxu0
        %v1846 = vadd.f32 %v1753, %v1845
        %v1847 = vpop.f32.mrf.mxu0
        %1848 = vdwg.mxu0
        %1849 = vmatpush.bf16.msra.mxu0 0
        %1850 = vmatpush.bf16.msra.mxu0 0
        %1851 = vmatpush.bf16.msra.mxu0 0
        %1852 = vmatpush.bf16.msra.mxu0 0
        %1853 = vmatpush.bf16.msra.mxu0 0
        %1854 = vmatpush.bf16.msra.mxu0 0
        %1855 = vmatpush.bf16.msra.mxu0 0
        %1856 = vmatpush.bf16.msra.mxu0 %v1747
        %1857 = vmatmul.bf16.gmra.mxu0 %v1756
        %v1858 = vpop.f32.mrf.mxu0
        %v1859 = vadd.f32 %v1753, %v1858
        %v1860 = vpop.f32.mrf.mxu0
        %1861 = vdwg.mxu0
        %v1870 = vrot.slane %v1781, 4
        %v1871 = vrot.slane %v1807, 4
        %v1872 = vrot.slane %v1833, 4
        %v1873 = vrot.slane %v1859, 4
        %vm1874 = vcmask 1043456
        %v1875 = vsel %vm1874, %v1768, %v1870
        %v1876 = vsel %vm1874, %v1794, %v1871
        %v1877 = vsel %vm1874, %v1820, %v1872
        %v1878 = vsel %vm1874, %v1846, %v1873
        %1883 = vst [vmem:[%s434] sm:$0x77] %v1875
        %1884 = vst [vmem:[%s434 + $0x8] sm:$0x77] %v1876
        %1885 = vst [vmem:[%s434 + $0x10] sm:$0x77] %v1877
        %1886 = vst [vmem:[%s434 + $0x18] sm:$0x77] %v1878
        %s1887 = sand.u32 %s313, 1
        %s1888 = scalar_lea.sflag [#allocation3], %s1887
        %s1889 = sand.u32 %s313, 1
        %s1890 = smul.addr %s1889, 32
        %s1891 = scalar_lea.vmem [#allocation2], %s1890
        // Predicated region
        $region73: #{tpu_custom_call.1} parent=71 // pred_check
          %p1892 = pneg %p323
        $region74: #{tpu_custom_call.1} parent=71 // pred_check_branch
          %1894 = sbr.rel (%p1892) target = $region76
        $region75: #{tpu_custom_call.1} parent=71 // pred_region
          %s1895 = smul.u32 8, %s27
          %1897 = vsyncadd %s1888, 0
          %s1898 = smul.addr %s1895, 4
          %s1899 = scalar_lea.hbm %s13, %s1898
          %s1901 = sshll.u32 %s1891, 4
          %s1902 = int_to_ptr.vmem [resolvable:$true] %s1901
          %s1903 = sshll.u32 %s1899, 4
          %s1904 = int_to_ptr.hbm [resolvable:$true] %s1903
          %1906 = dma.vmem_to_hbm [thread:$0]  %s1902, 512, %s1904, %s1888
        $region76: #{tpu_custom_call.1} parent=71 // pred_fallthru
          _
      $region72: #{tpu_custom_call.1} parent=5 // pred_fallthru
        _
      %p1907 = scmp.le.s32.totalorder 2, %s22
      // Predicated region
      $region77: #{tpu_custom_call.1} parent=5 // pred_check
        %p1908 = pneg %p1907
      $region78: #{tpu_custom_call.1} parent=5 // pred_check_branch
        %1910 = sbr.rel (%p1908) target = $region80
      $region79: #{tpu_custom_call.1} parent=5 // pred_region
        %s1911 = ssub.s32 %s22, 2
        // Predicated region
        $region81: #{tpu_custom_call.1} parent=79 // pred_check
          %p1912 = pneg %p329
        $region82: #{tpu_custom_call.1} parent=79 // pred_check_branch
          %1914 = sbr.rel (%p1912) target = $region84
        $region83: #{tpu_custom_call.1} parent=79 // pred_region
          %s1915 = sand.u32 %s314, 1
          %s1916 = scalar_lea.sflag [#allocation3], %s1915
          %s1917 = sand.u32 %s314, 1
          %s1918 = smul.addr %s1917, 32
          %s1919 = scalar_lea.vmem [#allocation2], %s1918
          %1921 = dma.done %s1916, 512
        $region84: #{tpu_custom_call.1} parent=79 // pred_fallthru
          _
      $region80: #{tpu_custom_call.1} parent=5 // pred_fallthru
        _
    $region6: #{tpu_custom_call.1} parent=1 // loop_footer
      %s26 = sadd.s32 1, %s22
    $region7: #{tpu_custom_call.1} parent=1 // loop_footer_branch
      %21 = sbr.rel target = $region3
    $region8: #{tpu_custom_call.1} parent=1 // loop_exit
      _
    %1922 = vsyncpa [#allocation3], 1
    %s1923 = scalar_lea.sflag [#allocation3], 1
    %1924 = vsyncpa %s1923, 1

</llo_original>
